<compile_context>
chip_gen: v6e
topology: v6e:2x2x1
jax: 0.10.0
libtpu: 0.0.40
codegen_flags: <defaults>
</compile_context>

<pallas_src>
import functools

import jax
import jax.numpy as jnp
from jax.experimental import pallas as pl
from jax.experimental.pallas import tpu as pltpu


_VMEM_LIMIT = 32 * 1024 * 1024  # explicit scoped-VMEM budget (safe on v5e/v6e/v7x)
_ALIGN = 16                     # scratch data column offset (bf16 packs 16 sublanes/vreg)


# --------------------------------------------------------------------------
# Cost estimates (advisory; lets XLA schedule neighbouring reshapes sensibly)
# --------------------------------------------------------------------------
def _bneck_cost(n, h, w, cin, e, c, stride):
    hw_i = h * w
    hw_o = hw_i // (stride * stride)
    flops = 2 * n * (hw_i * cin * e + hw_o * e * c) + 18 * n * hw_o * e
    bytes_accessed = (2 * n * (hw_i * cin + hw_o * c)          # bf16 activations
                      + 2 * (cin * e + e * c + 9 * e)          # bf16 weights
                      + 4 * (2 * e + c))                       # f32 biases
    return pl.CostEstimate(flops=flops, transcendentals=0,
                           bytes_accessed=bytes_accessed)


def _mm_cost(m, k, n_out):
    return pl.CostEstimate(flops=2 * m * k * n_out, transcendentals=0,
                           bytes_accessed=2 * (m * k + m * n_out + k * n_out))


# --------------------------------------------------------------------------
# Pallas kernels
# --------------------------------------------------------------------------
def _mm_bias_act_kernel(x_ref, w_ref, b_ref, o_ref, *, act):
    """(tm, K) @ (K, N) with BN-scale already folded into W; bias + activation."""
    y = jnp.dot(x_ref[...], w_ref[...], preferred_element_type=jnp.float32)
    y = y + b_ref[...]
    if act == "relu6":
        y = jnp.clip(y, 0.0, 6.0)
    elif act == "relu":
        y = jnp.maximum(y, 0.0)
    o_ref[...] = y.astype(o_ref.dtype)


def _bneck_s1_kernel(x_ref, we_ref, be_ref, wd_ref, bd_ref, wp_ref, bp_ref,
                     o_ref, xp_scr, *, H, W, use_shortcut):
    """Fused stride-1 bottleneck for one image.

    x_ref:  (1, H, W, Cin) bf16            we_ref: (Cin, E) bf16 (BN scale folded)
    wd_ref: (9, 1, E) bf16 (scale folded)  wp_ref: (E, C)  bf16 (scale folded)
    xp_scr: VMEM (H+2, W+_ALIGN+1, E) bf16 -- expanded activation; data lives at
            rows 1..H, cols _ALIGN.._ALIGN+W-1 (aligned store); taps read at
            column offsets _ALIGN-1/_ALIGN/_ALIGN+1 and row offsets 0/1/2.
    """
    cin = x_ref.shape[-1]
    e = we_ref.shape[-1]
    c = wp_ref.shape[-1]
    A = _ALIGN
    zdt = xp_scr.dtype

    # ---- zero ONLY the halo cells read by the taps (no full memset/step) ----
    xp_scr[0:1, A - 1:A + W + 1, :] = jnp.zeros((1, W + 2, e), zdt)       # top row
    xp_scr[H + 1:H + 2, A - 1:A + W + 1, :] = jnp.zeros((1, W + 2, e), zdt)  # bottom row
    xp_scr[1:H + 1, A - 1:A, :] = jnp.zeros((H, 1, e), zdt)               # left col
    xp_scr[1:H + 1, A + W:A + W + 1, :] = jnp.zeros((H, 1, e), zdt)       # right col

    # ---- expand 1x1 + folded BN bias + ReLU6, stored bf16 in VMEM ----
    x2d = x_ref[...].reshape(H * W, cin)
    ye = jnp.dot(x2d, we_ref[...], preferred_element_type=jnp.float32)
    ye = jnp.clip(ye + be_ref[...], 0.0, 6.0)
    xp_scr[1:H + 1, A:A + W, :] = ye.astype(zdt).reshape(H, W, e)

    # ---- depthwise 3x3 stride 1: 9 shifted views, bf16 products, f32 accum ----
    acc = None
    for kh in range(3):
        for kw in range(3):
            tap = xp_scr[kh:kh + H, A - 1 + kw:A - 1 + kw + W, :] * wd_ref[kh * 3 + kw]
            acc = tap.astype(jnp.float32) if acc is None else acc + tap
    yd = jnp.clip(acc + bd_ref[...], 0.0, 6.0)

    # ---- project 1x1 (+ fused residual add) ----
    yp = jnp.dot(yd.reshape(H * W, e).astype(wp_ref.dtype), wp_ref[...],
                 preferred_element_type=jnp.float32) + bp_ref[...]
    if use_shortcut:
        yp = yp + x2d.astype(jnp.float32)  # Cin == C when use_shortcut
    o_ref[...] = yp.reshape(1, H, W, c).astype(o_ref.dtype)


def _bneck_s2_kernel(x_ref, we_ref, be_ref, wd_ref, bd_ref, wp_ref, bp_ref,
                     o_ref, sc, *, H2, W2):
    """Fused stride-2 bottleneck for one image.

    The wrapper de-interleaves the input into 4 spatial-parity planes:
      x_ref: (1, 4, H2, W2, Cin) with plane = dr*2+dc holding x[2a+dr, 2b+dc].
    Scratch sc: (4, H2+1, W2+_ALIGN, E) bf16 holds the expanded activation,
    de-interleaved so every depthwise tap is a contiguous slice (no strided
    VMEM access).  Data is written at column _ALIGN (aligned); only row 0 of
    every slot and column _ALIGN-1 are halo and get zeroed per step.
    """
    cin = x_ref.shape[-1]
    e = we_ref.shape[-1]
    c = wp_ref.shape[-1]
    A = _ALIGN
    zdt = sc.dtype

    # ---- zero only the halo cells (before the interior writes below) ----
    sc[:, 0:1, :, :] = jnp.zeros((4, 1, W2 + A, e), zdt)        # top halo row of each slot
    sc[:, :, A - 1:A, :] = jnp.zeros((4, H2 + 1, 1, e), zdt)    # kw=0 halo column

    # ---- expand: ONE matmul over all 4 parity planes (single MXU fill) ----
    x2d = x_ref[...].reshape(4 * H2 * W2, cin)
    ye = jnp.dot(x2d, we_ref[...], preferred_element_type=jnp.float32)
    ye = jnp.clip(ye + be_ref[...], 0.0, 6.0)
    ye4 = ye.astype(zdt).reshape(4, H2, W2, e)
    for plane in range(4):
        dr, dc = plane // 2, plane % 2
        slot = (1 - dr) * 2 + (1 - dc)
        sc[slot, dr:dr + H2, A:A + W2, :] = ye4[plane]

    # ---- depthwise 3x3 stride 2: each tap is a contiguous slice ----
    acc = None
    for kh in range(3):
        for kw in range(3):
            slot = (kh % 2) * 2 + (kw % 2)
            r0 = kh // 2
            c0 = A - 1 if kw == 0 else A
            tap = sc[slot, r0:r0 + H2, c0:c0 + W2, :] * wd_ref[kh * 3 + kw]
            acc = tap.astype(jnp.float32) if acc is None else acc + tap
    yd = jnp.clip(acc + bd_ref[...], 0.0, 6.0)

    # ---- project 1x1 (stride-2 blocks never have a shortcut) ----
    yp = jnp.dot(yd.reshape(H2 * W2, e).astype(wp_ref.dtype), wp_ref[...],
                 preferred_element_type=jnp.float32) + bp_ref[...]
    o_ref[...] = yp.reshape(1, H2, W2, c).astype(o_ref.dtype)


def _head_kernel(x_ref, wl_ref, bl_ref, wo_ref, o_ref, *, S):
    """Fused head for one image: last 1x1 conv + BN + ReLU6, global average
    pool (== F.avg_pool2d(x, h//32) here) and the bias-free classifier."""
    cin = x_ref.shape[-1]
    xin = x_ref[...].reshape(S * S, cin)
    y = jnp.dot(xin, wl_ref[...], preferred_element_type=jnp.float32)
    y = jnp.clip(y + bl_ref[...], 0.0, 6.0)
    pooled = jnp.mean(y, axis=0, keepdims=True)                   # (1, last_c)
    logits = jnp.dot(pooled.astype(wo_ref.dtype), wo_ref[...],
                     preferred_element_type=jnp.float32)
    o_ref[...] = logits.reshape(1, 1, -1).astype(o_ref.dtype)


# --------------------------------------------------------------------------
# Pallas wrappers
# --------------------------------------------------------------------------
def _pick_tile(m, cap=1024):
    """Largest divisor of m (<= cap) that still leaves >= 2 grid steps."""
    for t in (1024, 512, 256, 128, 64, 32, 16, 8):
        if t <= cap and m % t == 0 and m // t >= 2:
            return t
    return m


def pointwise_conv(x2d, w, bias, act, out_dtype=jnp.bfloat16):
    """(M, K) @ (K, N) + bias (+activation), BN scale pre-folded into w."""
    m, k = x2d.shape
    n = w.shape[1]
    tm = _pick_tile(m)
    return pl.pallas_call(
        functools.partial(_mm_bias_act_kernel, act=act),
        out_shape=jax.ShapeDtypeStruct((m, n), out_dtype),
        grid_spec=pltpu.PrefetchScalarGridSpec(
            num_scalar_prefetch=0,
            grid=(m // tm,),
            in_specs=[
                pl.BlockSpec((tm, k), lambda i: (i, 0)),
                pl.BlockSpec((k, n), lambda i: (0, 0)),
                pl.BlockSpec((1, n), lambda i: (0, 0)),
            ],
            out_specs=pl.BlockSpec((tm, n), lambda i: (i, 0)),
        ),
        compiler_params=pltpu.CompilerParams(
            dimension_semantics=("parallel",), vmem_limit_bytes=_VMEM_LIMIT),
        cost_estimate=_mm_cost(m, k, n),
    )(x2d, w, bias)


def bottleneck_s1(x, blk):
    n, h, w, cin = x.shape
    e = blk["we"].shape[1]
    c = blk["wp"].shape[1]
    kern = functools.partial(_bneck_s1_kernel, H=h, W=w,
                             use_shortcut=blk["use_shortcut"])
    return pl.pallas_call(
        kern,
        out_shape=jax.ShapeDtypeStruct((n, h, w, c), jnp.bfloat16),
        grid_spec=pltpu.PrefetchScalarGridSpec(
            num_scalar_prefetch=0,
            grid=(n,),
            in_specs=[
                pl.BlockSpec((1, h, w, cin), lambda i: (i, 0, 0, 0)),
                pl.BlockSpec((cin, e), lambda i: (0, 0)),
                pl.BlockSpec((1, e), lambda i: (0, 0)),
                pl.BlockSpec((9, 1, e), lambda i: (0, 0, 0)),
                pl.BlockSpec((1, e), lambda i: (0, 0)),
                pl.BlockSpec((e, c), lambda i: (0, 0)),
                pl.BlockSpec((1, c), lambda i: (0, 0)),
            ],
            out_specs=pl.BlockSpec((1, h, w, c), lambda i: (i, 0, 0, 0)),
            scratch_shapes=[pltpu.VMEM((h + 2, w + _ALIGN + 1, e), jnp.bfloat16)],
        ),
        compiler_params=pltpu.CompilerParams(
            dimension_semantics=("parallel",), vmem_limit_bytes=_VMEM_LIMIT),
        cost_estimate=_bneck_cost(n, h, w, cin, e, c, stride=1),
    )(x, blk["we"], blk["be"], blk["wd"], blk["bd"], blk["wp"], blk["bp"])


def bottleneck_s2(x, blk):
    n, h, w, cin = x.shape
    assert h % 2 == 0 and w % 2 == 0, "stride-2 block needs even spatial dims"
    h2, w2 = h // 2, w // 2
    e = blk["we"].shape[1]
    c = blk["wp"].shape[1]
    # De-interleave spatial parity in the wrapper (cheap: Cin-wide tensor).
    # x5[n, dr*2+dc, a, b, :] = x[n, 2a+dr, 2b+dc, :]
    x5 = x.reshape(n, h2, 2, w2, 2, cin).transpose(0, 2, 4, 1, 3, 5)
    x5 = x5.reshape(n, 4, h2, w2, cin)
    kern = functools.partial(_bneck_s2_kernel, H2=h2, W2=w2)
    return pl.pallas_call(
        kern,
        out_shape=jax.ShapeDtypeStruct((n, h2, w2, c), jnp.bfloat16),
        grid_spec=pltpu.PrefetchScalarGridSpec(
            num_scalar_prefetch=0,
            grid=(n,),
            in_specs=[
                pl.BlockSpec((1, 4, h2, w2, cin), lambda i: (i, 0, 0, 0, 0)),
                pl.BlockSpec((cin, e), lambda i: (0, 0)),
                pl.BlockSpec((1, e), lambda i: (0, 0)),
                pl.BlockSpec((9, 1, e), lambda i: (0, 0, 0)),
                pl.BlockSpec((1, e), lambda i: (0, 0)),
                pl.BlockSpec((e, c), lambda i: (0, 0)),
                pl.BlockSpec((1, c), lambda i: (0, 0)),
            ],
            out_specs=pl.BlockSpec((1, h2, w2, c), lambda i: (i, 0, 0, 0)),
            scratch_shapes=[pltpu.VMEM((4, h2 + 1, w2 + _ALIGN, e), jnp.bfloat16)],
        ),
        compiler_params=pltpu.CompilerParams(
            dimension_semantics=("parallel",), vmem_limit_bytes=_VMEM_LIMIT),
        cost_estimate=_bneck_cost(n, h, w, cin, e, c, stride=2),
    )(x5, blk["we"], blk["be"], blk["wd"], blk["bd"], blk["wp"], blk["bp"])


def head(x, wl, bl, wo):
    n, s, s2, cin = x.shape
    assert s == s2, "head assumes a square feature map (global average pool)"
    last_c = wl.shape[1]
    classes = wo.shape[1]
    out = pl.pallas_call(
        functools.partial(_head_kernel, S=s),
        out_shape=jax.ShapeDtypeStruct((n, 1, classes), jnp.float32),
        grid_spec=pltpu.PrefetchScalarGridSpec(
            num_scalar_prefetch=0,
            grid=(n,),
            in_specs=[
                pl.BlockSpec((1, s, s, cin), lambda i: (i, 0, 0, 0)),
                pl.BlockSpec((cin, last_c), lambda i: (0, 0)),
                pl.BlockSpec((1, last_c), lambda i: (0, 0)),
                pl.BlockSpec((last_c, classes), lambda i: (0, 0)),
            ],
            out_specs=pl.BlockSpec((1, 1, classes), lambda i: (i, 0, 0)),
        ),
        compiler_params=pltpu.CompilerParams(
            dimension_semantics=("parallel",), vmem_limit_bytes=_VMEM_LIMIT),
        cost_estimate=pl.CostEstimate(
            flops=2 * n * (s * s * cin * last_c + last_c * classes),
            transcendentals=0,
            bytes_accessed=2 * n * (s * s * cin + classes)
                           + 2 * (cin * last_c + last_c * classes)),
    )(x, wl, bl, wo)
    return out.reshape(n, classes)


def _stem_im2col(x, stride=2):
    """im2col for the tiny 3-channel stem conv (traffic is negligible)."""
    n, h, w, c = x.shape
    ho = (h + 2 - 3) // stride + 1
    wo = (w + 2 - 3) // stride + 1
    xp = jnp.pad(x, ((0, 0), (1, 1), (1, 1), (0, 0)))
    taps = []
    for kh in range(3):
        for kw in range(3):
            taps.append(jax.lax.slice(
                xp, (0, kh, kw, 0),
                (n, kh + (ho - 1) * stride + 1, kw + (wo - 1) * stride + 1, c),
                (1, stride, stride, 1)))
    x2d = jnp.concatenate(taps, axis=-1).reshape(n * ho * wo, 9 * c)
    return x2d, ho, wo


# --------------------------------------------------------------------------
# Parameters (deterministic synthetic init, mirrors the PyTorch __init__).
# BN (inference mode) is folded: scale into the conv weights, bias kept.
# --------------------------------------------------------------------------
def _fold_bn(gamma, beta, mean, var, eps=1e-5):
    scale = gamma / jnp.sqrt(var + eps)
    bias = beta - mean * scale
    return scale, bias


def _conv_init(key, shape, fan_in):
    return jax.random.normal(key, shape, jnp.float32) / jnp.sqrt(float(fan_in))


def _bn_init(key, c):
    k1, k2, k3 = jax.random.split(key, 3)
    gamma = 1.0 + 0.1 * jax.random.normal(k1, (c,), jnp.float32)
    beta = 0.1 * jax.random.normal(k2, (c,), jnp.float32)
    mean = 0.05 * jax.random.normal(k3, (c,), jnp.float32)
    var = jnp.ones((c,), jnp.float32)
    return _fold_bn(gamma, beta, mean, var)


def build_mobilenet_v2_params(key, multiplier=1.0, classes=1000):
    keys = iter(jax.random.split(key, 128))
    params = {}

    c_stem = int(32 * multiplier)
    w = _conv_init(next(keys), (3, 3, 3, c_stem), 9 * 3)       # (kh, kw, cin, cout)
    s, b = _bn_init(next(keys), c_stem)
    params["stem_w"] = (w.reshape(27, c_stem) * s[None, :]).astype(jnp.bfloat16)
    params["stem_b"] = b.reshape(1, c_stem)

    in_channels_group = [int(x * multiplier) for x in
                         [32] + [16] + [24] * 2 + [32] * 3 + [64] * 4 + [96] * 3 + [160] * 3]
    channels_group = [int(x * multiplier) for x in
                      [16] + [24] * 2 + [32] * 3 + [64] * 4 + [96] * 3 + [160] * 3 + [320]]
    ts = [1] + [6] * 16
    strides = [1, 2] * 2 + [1, 1, 2] + [1] * 6 + [2] + [1] * 3

    blocks = []
    for in_c, c, t, st in zip(in_channels_group, channels_group, ts, strides):
        e = in_c * t
        we = _conv_init(next(keys), (in_c, e), in_c)            # 1x1 expand
        se, be = _bn_init(next(keys), e)
        wd = _conv_init(next(keys), (3, 3, e), 9)               # depthwise 3x3
        sd, bd = _bn_init(next(keys), e)
        wp = _conv_init(next(keys), (e, c), e)                  # 1x1 project
        sp, bp = _bn_init(next(keys), c)
        blocks.append({
            "we": (we * se[None, :]).astype(jnp.bfloat16),
            "be": be.reshape(1, e),
            "wd": (wd * sd[None, None, :]).reshape(9, 1, e).astype(jnp.bfloat16),
            "bd": bd.reshape(1, e),
            "wp": (wp * sp[None, :]).astype(jnp.bfloat16),
            "bp": bp.reshape(1, c),
            "stride": st,
            "use_shortcut": (st == 1 and in_c == c),
        })
    params["blocks"] = blocks

    last_c = int(1280 * multiplier) if multiplier > 1.0 else 1280
    c320 = int(320 * multiplier)
    wl = _conv_init(next(keys), (c320, last_c), c320)
    sl, bl = _bn_init(next(keys), last_c)
    params["last_w"] = (wl * sl[None, :]).astype(jnp.bfloat16)
    params["last_b"] = bl.reshape(1, last_c)
    params["out_w"] = _conv_init(next(keys), (last_c, classes), last_c).astype(jnp.bfloat16)
    return params


# --------------------------------------------------------------------------
# Forward pass
# --------------------------------------------------------------------------
def mobilenet_v2_forward(params, x_nchw):
    x = jnp.transpose(x_nchw, (0, 2, 3, 1)).astype(jnp.bfloat16)  # NCHW -> NHWC
    n = x.shape[0]

    # stem: 3x3 conv stride 2 pad 1 + folded BN + ReLU6 (im2col + fused matmul)
    x2d, ho, wo = _stem_im2col(x, stride=2)
    c_stem = params["stem_w"].shape[1]
    x = pointwise_conv(x2d, params["stem_w"], params["stem_b"], act="relu6")
    x = x.reshape(n, ho, wo, c_stem)

    # 17 fused inverted-residual bottlenecks
    for blk in params["blocks"]:
        if blk["stride"] == 1:
            x = bottleneck_s1(x, blk)
        else:
            x = bottleneck_s2(x, blk)

    # head: last 1x1 conv + BN + ReLU6, avg pool, classifier (fused, grid over batch)
    # TODO(synk): F.avg_pool2d(x, h//32) reduces to a global average pool only for
    # square inputs whose side is a multiple of 32 (true for this test input).
    y = head(x, params["last_w"], params["last_b"], params["out_w"])
    return y                                                       # == x.view(n, -1)


if __name__ == "__main__":
    key = jax.random.PRNGKey(0)
    pkey, xkey = jax.random.split(key)
    classes = 16
    params = build_mobilenet_v2_params(pkey, multiplier=1.0, classes=classes)
    x = jax.random.normal(xkey, (2, 3, 64, 64), jnp.float32)       # NCHW like PyTorch
    y = mobilenet_v2_forward(params, x)
    jax.block_until_ready(y)
    assert y.shape == (2, classes), y.shape
    assert bool(jnp.all(jnp.isfinite(y)))
    print("KERNEL_OK")
</pallas_src>

<mosaic_0001>
module attributes {stable_mosaic.version = 11 : i64} {
  func.func @_mm_bias_act_kernel(%arg0: i32, %arg1: memref<1024x27xbf16, #tpu.memory_space<vmem>>, %arg2: memref<27x32xbf16, #tpu.memory_space<vmem>>, %arg3: memref<1x32xf32, #tpu.memory_space<vmem>>, %arg4: memref<1024x32xbf16, #tpu.memory_space<vmem>>) attributes {dimension_semantics = [#tpu.dimension_semantics<parallel>], iteration_bounds = array<i64: 2>, scalar_prefetch = 0 : i64, scratch_operands = 0 : i64, tpu.core_type = #tpu.core_type<tc>, window_params = [{transform_indices = @transform_0, window_bounds = array<i64: 1024, 27>}, {pipeline_mode = #tpu.pipeline_mode<synchronous>, transform_indices = @transform_1, window_bounds = array<i64: 27, 32>}, {pipeline_mode = #tpu.pipeline_mode<synchronous>, transform_indices = @transform_2, window_bounds = array<i64: 1, 32>}, {transform_indices = @transform_3, window_bounds = array<i64: 1024, 32>}]} {
    %c0 = arith.constant 0 : index
    %c0_0 = arith.constant 0 : index
    %0 = vector.load %arg1[%c0, %c0_0] : memref<1024x27xbf16, #tpu.memory_space<vmem>>, vector<1024x27xbf16>
    %c0_1 = arith.constant 0 : index
    %c0_2 = arith.constant 0 : index
    %1 = vector.load %arg2[%c0_1, %c0_2] : memref<27x32xbf16, #tpu.memory_space<vmem>>, vector<27x32xbf16>
    %cst = arith.constant dense<0.000000e+00> : vector<1024x32xf32>
    %2 = tpu.matmul %0, %1, %cst {dimension_numbers = #tpu.dot_dimension_numbers<[1], [0], [0], [1], [0, 0, 1, 1], [], []>} : vector<1024x27xbf16>, vector<27x32xbf16>, vector<1024x32xf32> -> vector<1024x32xf32>
    %c0_3 = arith.constant 0 : index
    %c0_4 = arith.constant 0 : index
    %3 = vector.load %arg3[%c0_3, %c0_4] : memref<1x32xf32, #tpu.memory_space<vmem>>, vector<1x32xf32>
    %4 = vector.broadcast %3 : vector<1x32xf32> to vector<1024x32xf32>
    %5 = arith.addf %2, %4 : vector<1024x32xf32>
    %cst_5 = arith.constant 0.000000e+00 : f32
    %cst_6 = arith.constant 6.000000e+00 : f32
    %6 = vector.broadcast %cst_5 : f32 to vector<1024x32xf32>
    %7 = arith.maximumf %6, %5 : vector<1024x32xf32>
    %8 = vector.broadcast %cst_6 : f32 to vector<1024x32xf32>
    %9 = arith.minimumf %8, %7 : vector<1024x32xf32>
    %10 = arith.truncf %9 : vector<1024x32xf32> to vector<1024x32xbf16>
    %c0_7 = arith.constant 0 : index
    %c0_8 = arith.constant 0 : index
    %11 = vector.load %arg4[%c0_7, %c0_8] : memref<1024x32xbf16, #tpu.memory_space<vmem>>, vector<1024x32xbf16>
    tpu.vector_store %arg4[%c0_7, %c0_8], %10 {strides = array<i32>} : memref<1024x32xbf16, #tpu.memory_space<vmem>>, vector<1024x32xbf16>,
    return
  }
  func.func @transform_0(%arg0: i32) -> (i32, i32) {
    %c0_i32 = arith.constant 0 : i32
    %c0_i32_0 = arith.constant 0 : i32
    return %arg0, %c0_i32 : i32, i32
  }
  func.func @transform_1(%arg0: i32) -> (i32, i32) {
    %c0_i32 = arith.constant 0 : i32
    %c0_i32_0 = arith.constant 0 : i32
    %c0_i32_1 = arith.constant 0 : i32
    return %c0_i32, %c0_i32_0 : i32, i32
  }
  func.func @transform_2(%arg0: i32) -> (i32, i32) {
    %c0_i32 = arith.constant 0 : i32
    %c0_i32_0 = arith.constant 0 : i32
    %c0_i32_1 = arith.constant 0 : i32
    return %c0_i32, %c0_i32_0 : i32, i32
  }
  func.func @transform_3(%arg0: i32) -> (i32, i32) {
    %c0_i32 = arith.constant 0 : i32
    %c0_i32_0 = arith.constant 0 : i32
    return %arg0, %c0_i32 : i32, i32
  }
}

</mosaic_0001>

<llo_original>
// kernel: tpu_custom_call.1
$region0: #{tpu_custom_call.1}
  #allocation0 [shape = 'u32[]', space=smem, size = 0x4, offset = 0x4, fixed_abs, tag = 'smem constant byte address 0x4 - core index']
  #allocation1 [shape = 'u32[144,128]{1,0:T(1,128)}', space=vmem, size = 0x12000, scoped, tag = 'internal scratch']
  %s0 = inlined_call_operand.vmem [shape: bf16[2048,27], index: 0, kind: input, shape index: {}]
  %s1 = inlined_call_operand.vmem [shape: bf16[27,32], index: 1, kind: input, shape index: {}]
  %s2 = inlined_call_operand.vmem [shape: f32[1,32], index: 2, kind: input, shape index: {}]
  %s3 = inlined_call_operand.vmem [shape: bf16[2048,32], index: 3, kind: output, shape index: {}]
  %s4 = sld [smem:[#allocation0]]
  $region45: #{tpu_custom_call.1} parent=0
    _
  %s6 = ssub.s32 1, %s4
  %s7 = scalar_select 0, %s6, %s4
  loop: start=0, step=1, limit=4
  $region2: #{tpu_custom_call.1} parent=0 // loop_pre_header
    _
  $region3: #{tpu_custom_call.1} parent=0 // loop_header
    %s9 = sphi 0, %s13
    %p10 = scmp.ge.s32.totalorder %s9, 4
    %s19 = sphi 0, %s21
    %s22 = sphi 0, %s19
    %s23 = sphi 0, %s22
    %s39 = sphi 0, %s23
    %s43 = sphi 0, %s43
    %s45 = sphi 0, %s43
    %s46 = sphi 0, %s45
    %s60 = sphi 0, %s46
    %s64 = sphi 0, %s64
    %s66 = sphi 0, %s64
    %s67 = sphi 0, %s66
    %s81 = sphi 0, %s67
    %s87 = sphi 0, %s89
    %s90 = sphi 0, %s87
    %s91 = sphi 0, %s90
    %s107 = sphi 0, %s91
  $region4: #{tpu_custom_call.1} parent=0 // loop_header_branch
    %12 = sbr.rel (%p10) target = $region8
  $region5: #{tpu_custom_call.1} parent=0 // loop_body
    %s14 = ssub.s32 %s9, 1
    %s15 = ssub.s32 %s9, 2
    %s16 = sadd.s32 %s9, 1
    %s17 = ssub.s32 %s9, %s16
    %p18 = scmp.eq.s32.totalorder %s17, 0
    %s20 = sadd.s32 %s19, 1
    %s21 = scalar_select %p18, %s19, %s20
    %p24 = pneg %p18
    %p25 = scmp.eq.s32.totalorder %s9, 1
    %p26 = por %p24, %p25
    %p27 = scmp.ne.s32.totalorder %s19, %s22
    %p28 = scmp.eq.s32.totalorder %s9, 0
    %p29 = por %p27, %p28
    %p30 = scmp.ne.s32.totalorder %s19, %s22
    %p31 = scmp.eq.s32.totalorder %s14, 1
    %p32 = por %p30, %p31
    %p33 = scmp.ne.s32.totalorder %s22, %s23
    %p34 = scmp.eq.s32.totalorder %s14, 0
    %p35 = por %p33, %p34
    %p36 = scmp.ne.s32.totalorder %s22, %s23
    %p37 = scmp.eq.s32.totalorder %s15, 1
    %p38 = por %p36, %p37
    %p40 = scmp.ne.s32.totalorder %s23, %s39
    %p41 = scmp.eq.s32.totalorder %s15, 0
    %p42 = por %p40, %p41
    %s44 = sadd.s32 %s43, 1
    %p47 = scmp.eq.s32.totalorder %s9, 1
    %p48 = scmp.ne.s32.totalorder %s43, %s45
    %p49 = scmp.eq.s32.totalorder %s9, 0
    %p50 = por %p48, %p49
    %p51 = scmp.ne.s32.totalorder %s43, %s45
    %p52 = scmp.eq.s32.totalorder %s14, 1
    %p53 = por %p51, %p52
    %p54 = scmp.ne.s32.totalorder %s45, %s46
    %p55 = scmp.eq.s32.totalorder %s14, 0
    %p56 = por %p54, %p55
    %p57 = scmp.ne.s32.totalorder %s45, %s46
    %p58 = scmp.eq.s32.totalorder %s15, 1
    %p59 = por %p57, %p58
    %p61 = scmp.ne.s32.totalorder %s46, %s60
    %p62 = scmp.eq.s32.totalorder %s15, 0
    %p63 = por %p61, %p62
    %s65 = sadd.s32 %s64, 1
    %p68 = scmp.eq.s32.totalorder %s9, 1
    %p69 = scmp.ne.s32.totalorder %s64, %s66
    %p70 = scmp.eq.s32.totalorder %s9, 0
    %p71 = por %p69, %p70
    %p72 = scmp.ne.s32.totalorder %s64, %s66
    %p73 = scmp.eq.s32.totalorder %s14, 1
    %p74 = por %p72, %p73
    %p75 = scmp.ne.s32.totalorder %s66, %s67
    %p76 = scmp.eq.s32.totalorder %s14, 0
    %p77 = por %p75, %p76
    %p78 = scmp.ne.s32.totalorder %s66, %s67
    %p79 = scmp.eq.s32.totalorder %s15, 1
    %p80 = por %p78, %p79
    %p82 = scmp.ne.s32.totalorder %s67, %s81
    %p83 = scmp.eq.s32.totalorder %s15, 0
    %p84 = por %p82, %p83
    %s85 = ssub.s32 %s9, %s16
    %p86 = scmp.eq.s32.totalorder %s85, 0
    %s88 = sadd.s32 %s87, 1
    %s89 = scalar_select %p86, %s87, %s88
    %p92 = pneg %p86
    %p93 = scmp.eq.s32.totalorder %s9, 1
    %p94 = por %p92, %p93
    %p95 = scmp.ne.s32.totalorder %s87, %s90
    %p96 = scmp.eq.s32.totalorder %s9, 0
    %p97 = por %p95, %p96
    %p98 = scmp.ne.s32.totalorder %s87, %s90
    %p99 = scmp.eq.s32.totalorder %s14, 1
    %p100 = por %p98, %p99
    %p101 = scmp.ne.s32.totalorder %s90, %s91
    %p102 = scmp.eq.s32.totalorder %s14, 0
    %p103 = por %p101, %p102
    %p104 = scmp.ne.s32.totalorder %s90, %s91
    %p105 = scmp.eq.s32.totalorder %s15, 1
    %p106 = por %p104, %p105
    %p108 = scmp.ne.s32.totalorder %s91, %s107
    %p109 = scmp.eq.s32.totalorder %s15, 0
    %p110 = por %p108, %p109
    %p111 = scmp.le.s32.totalorder 1, %s9
    %p112 = scmp.lt.s32.totalorder %s9, 3
    %p113 = pnand %p111, %p112
    %p114 = pneg %p113
    // Predicated region
    $region9: #{tpu_custom_call.1} parent=5 // pred_check
      _
    $region10: #{tpu_custom_call.1} parent=5 // pred_check_branch
      %116 = sbr.rel (%p113) target = $region12
    $region11: #{tpu_custom_call.1} parent=5 // pred_region
      %s117 = ssub.s32 %s9, 1
      // Predicated region
      $region13: #{tpu_custom_call.1} parent=11 // pred_check
        %p118 = pneg %p56
      $region14: #{tpu_custom_call.1} parent=11 // pred_check_branch
        %120 = sbr.rel (%p118) target = $region16
      $region15: #{tpu_custom_call.1} parent=11 // pred_region
        _
      $region16: #{tpu_custom_call.1} parent=11 // pred_fallthru
        _
      // Predicated region
      $region17: #{tpu_custom_call.1} parent=11 // pred_check
        %p121 = pneg %p77
      $region18: #{tpu_custom_call.1} parent=11 // pred_check_branch
        %123 = sbr.rel (%p121) target = $region20
      $region19: #{tpu_custom_call.1} parent=11 // pred_region
        _
      $region20: #{tpu_custom_call.1} parent=11 // pred_fallthru
        _
    $region12: #{tpu_custom_call.1} parent=5 // pred_fallthru
      _
    %p124 = scmp.lt.s32.totalorder %s9, 2
    // Predicated region
    $region21: #{tpu_custom_call.1} parent=5 // pred_check
      %p125 = pneg %p124
    $region22: #{tpu_custom_call.1} parent=5 // pred_check_branch
      %127 = sbr.rel (%p125) target = $region24
    $region23: #{tpu_custom_call.1} parent=5 // pred_region
      // Predicated region
      $region25: #{tpu_custom_call.1} parent=23 // pred_check
        %p128 = pneg %p29
      $region26: #{tpu_custom_call.1} parent=23 // pred_check_branch
        %130 = sbr.rel (%p128) target = $region28
      $region27: #{tpu_custom_call.1} parent=23 // pred_region
        %s131 = smul.u32 128, %s9
        %p132 = scmp.lt.s32.totalorder %s131, 255
        %s133 = scalar_select %p132, %s131, 255
        %s134 = smul.addr %s133, 4
        %s135 = scalar_lea.vmem %s0, %s134
        %s136 = smul.u32 128, %s9
      $region28: #{tpu_custom_call.1} parent=23 // pred_fallthru
        _
    $region24: #{tpu_custom_call.1} parent=5 // pred_fallthru
      _
    %p137 = scmp.le.s32.totalorder 1, %s9
    %p138 = scmp.lt.s32.totalorder %s9, 3
    %p139 = pnand %p137, %p138
    %p140 = pneg %p139
    // Predicated region
    $region29: #{tpu_custom_call.1} parent=5 // pred_check
      _
    $region30: #{tpu_custom_call.1} parent=5 // pred_check_branch
      %142 = sbr.rel (%p139) target = $region32
    $region31: #{tpu_custom_call.1} parent=5 // pred_region
      %s143 = ssub.s32 %s9, 1
      %s144 = smul.u32 128, %s14
      %p145 = scmp.lt.s32.totalorder %s144, 255
      %s146 = scalar_select %p145, %s144, 255
      %s147 = smul.addr %s146, 4
      %s148 = scalar_lea.vmem %s0, %s147
      %p149 = pneg %p35
      %p150 = pneg %p32
      %p151 = pneg %p56
      %p152 = pneg %p53
      %p153 = pneg %p77
      %p154 = pneg %p74
      %p155 = pneg %p103
      %p156 = pneg %p100
      %s157 = smul.u32 128, %s14
      %p158 = scmp.lt.s32.totalorder %s157, 255
      %s159 = scalar_select %p158, %s157, 255
      %s160 = smul.addr %s159, 4
      %s161 = scalar_lea.vmem %s3, %s160
      %s162 = smul.u32 128, %s14
      %p163 = scmp.lt.s32.totalorder %s162, 255
      %s164 = scalar_select %p163, %s162, 255
      %s165 = smul.addr %s164, 4
      %s166 = scalar_lea.vmem %s0, %s165
      %s167 = smul.u32 128, %s14
      %s168 = smul.u32 128, %s14
      %p169 = scmp.lt.s32.totalorder %s168, 255
      %s170 = scalar_select %p169, %s168, 255
      %s171 = smul.addr %s170, 4
      %s172 = scalar_lea.vmem %s3, %s171
      %s173 = smul.u32 128, %s14
      %v175 = vld [vmem:[%s166] sm:$0xf]
      %v176 = vld [vmem:[%s166 + $0x4] sm:$0xf]
      %v177 = vld [vmem:[%s166 + $0x8] sm:$0xf]
      %v178 = vld [vmem:[%s166 + $0xc] sm:$0xf]
      %v179 = vld [vmem:[%s166 + $0x10] sm:$0xf]
      %v180 = vld [vmem:[%s166 + $0x14] sm:$0xf]
      %v181 = vld [vmem:[%s166 + $0x18] sm:$0xf]
      %v182 = vld [vmem:[%s166 + $0x1c] sm:$0xf]
      %v183 = vld [vmem:[%s166 + $0x20] sm:$0xf]
      %v184 = vld [vmem:[%s166 + $0x24] sm:$0xf]
      %v185 = vld [vmem:[%s166 + $0x28] sm:$0xf]
      %v186 = vld [vmem:[%s166 + $0x2c] sm:$0xf]
      %v187 = vld [vmem:[%s166 + $0x30] sm:$0xf]
      %v188 = vld [vmem:[%s166 + $0x34] sm:$0xf]
      %v189 = vld [vmem:[%s166 + $0x38] sm:$0xf]
      %v190 = vld [vmem:[%s166 + $0x3c] sm:$0xf]
      %v191 = vld [vmem:[%s166 + $0x40] sm:$0xf]
      %v192 = vld [vmem:[%s166 + $0x44] sm:$0xf]
      %v193 = vld [vmem:[%s166 + $0x48] sm:$0xf]
      %v194 = vld [vmem:[%s166 + $0x4c] sm:$0xf]
      %v195 = vld [vmem:[%s166 + $0x50] sm:$0xf]
      %v196 = vld [vmem:[%s166 + $0x54] sm:$0xf]
      %v197 = vld [vmem:[%s166 + $0x58] sm:$0xf]
      %v198 = vld [vmem:[%s166 + $0x5c] sm:$0xf]
      %v199 = vld [vmem:[%s166 + $0x60] sm:$0xf]
      %v200 = vld [vmem:[%s166 + $0x64] sm:$0xf]
      %v201 = vld [vmem:[%s166 + $0x68] sm:$0xf]
      %v202 = vld [vmem:[%s166 + $0x6c] sm:$0xf]
      %v203 = vld [vmem:[%s166 + $0x70] sm:$0xf]
      %v204 = vld [vmem:[%s166 + $0x74] sm:$0xf]
      %v205 = vld [vmem:[%s166 + $0x78] sm:$0xf]
      %v206 = vld [vmem:[%s166 + $0x7c] sm:$0xf]
      %v207 = vld [vmem:[%s166 + $0x80] sm:$0xf]
      %v208 = vld [vmem:[%s166 + $0x84] sm:$0xf]
      %v209 = vld [vmem:[%s166 + $0x88] sm:$0xf]
      %v210 = vld [vmem:[%s166 + $0x8c] sm:$0xf]
      %v211 = vld [vmem:[%s166 + $0x90] sm:$0xf]
      %v212 = vld [vmem:[%s166 + $0x94] sm:$0xf]
      %v213 = vld [vmem:[%s166 + $0x98] sm:$0xf]
      %v214 = vld [vmem:[%s166 + $0x9c] sm:$0xf]
      %v215 = vld [vmem:[%s166 + $0xa0] sm:$0xf]
      %v216 = vld [vmem:[%s166 + $0xa4] sm:$0xf]
      %v217 = vld [vmem:[%s166 + $0xa8] sm:$0xf]
      %v218 = vld [vmem:[%s166 + $0xac] sm:$0xf]
      %v219 = vld [vmem:[%s166 + $0xb0] sm:$0xf]
      %v220 = vld [vmem:[%s166 + $0xb4] sm:$0xf]
      %v221 = vld [vmem:[%s166 + $0xb8] sm:$0xf]
      %v222 = vld [vmem:[%s166 + $0xbc] sm:$0xf]
      %v223 = vld [vmem:[%s166 + $0xc0] sm:$0xf]
      %v224 = vld [vmem:[%s166 + $0xc4] sm:$0xf]
      %v225 = vld [vmem:[%s166 + $0xc8] sm:$0xf]
      %v226 = vld [vmem:[%s166 + $0xcc] sm:$0xf]
      %v227 = vld [vmem:[%s166 + $0xd0] sm:$0xf]
      %v228 = vld [vmem:[%s166 + $0xd4] sm:$0xf]
      %v229 = vld [vmem:[%s166 + $0xd8] sm:$0xf]
      %v230 = vld [vmem:[%s166 + $0xdc] sm:$0xf]
      %v231 = vld [vmem:[%s166 + $0xe0] sm:$0xf]
      %v232 = vld [vmem:[%s166 + $0xe4] sm:$0xf]
      %v233 = vld [vmem:[%s166 + $0xe8] sm:$0xf]
      %v234 = vld [vmem:[%s166 + $0xec] sm:$0xf]
      %v235 = vld [vmem:[%s166 + $0xf0] sm:$0xf]
      %v236 = vld [vmem:[%s166 + $0xf4] sm:$0xf]
      %v237 = vld [vmem:[%s166 + $0xf8] sm:$0xf]
      %v238 = vld [vmem:[%s166 + $0xfc] sm:$0xf]
      %v239 = vld [vmem:[%s166 + $0x100] sm:$0xf]
      %v240 = vld [vmem:[%s166 + $0x104] sm:$0xf]
      %v241 = vld [vmem:[%s166 + $0x108] sm:$0xf]
      %v242 = vld [vmem:[%s166 + $0x10c] sm:$0xf]
      %v243 = vld [vmem:[%s166 + $0x110] sm:$0xf]
      %v244 = vld [vmem:[%s166 + $0x114] sm:$0xf]
      %v245 = vld [vmem:[%s166 + $0x118] sm:$0xf]
      %v246 = vld [vmem:[%s166 + $0x11c] sm:$0xf]
      %v247 = vld [vmem:[%s166 + $0x120] sm:$0xf]
      %v248 = vld [vmem:[%s166 + $0x124] sm:$0xf]
      %v249 = vld [vmem:[%s166 + $0x128] sm:$0xf]
      %v250 = vld [vmem:[%s166 + $0x12c] sm:$0xf]
      %v251 = vld [vmem:[%s166 + $0x130] sm:$0xf]
      %v252 = vld [vmem:[%s166 + $0x134] sm:$0xf]
      %v253 = vld [vmem:[%s166 + $0x138] sm:$0xf]
      %v254 = vld [vmem:[%s166 + $0x13c] sm:$0xf]
      %v255 = vld [vmem:[%s166 + $0x140] sm:$0xf]
      %v256 = vld [vmem:[%s166 + $0x144] sm:$0xf]
      %v257 = vld [vmem:[%s166 + $0x148] sm:$0xf]
      %v258 = vld [vmem:[%s166 + $0x14c] sm:$0xf]
      %v259 = vld [vmem:[%s166 + $0x150] sm:$0xf]
      %v260 = vld [vmem:[%s166 + $0x154] sm:$0xf]
      %v261 = vld [vmem:[%s166 + $0x158] sm:$0xf]
      %v262 = vld [vmem:[%s166 + $0x15c] sm:$0xf]
      %v263 = vld [vmem:[%s166 + $0x160] sm:$0xf]
      %v264 = vld [vmem:[%s166 + $0x164] sm:$0xf]
      %v265 = vld [vmem:[%s166 + $0x168] sm:$0xf]
      %v266 = vld [vmem:[%s166 + $0x16c] sm:$0xf]
      %v267 = vld [vmem:[%s166 + $0x170] sm:$0xf]
      %v268 = vld [vmem:[%s166 + $0x174] sm:$0xf]
      %v269 = vld [vmem:[%s166 + $0x178] sm:$0xf]
      %v270 = vld [vmem:[%s166 + $0x17c] sm:$0xf]
      %v271 = vld [vmem:[%s166 + $0x180] sm:$0xf]
      %v272 = vld [vmem:[%s166 + $0x184] sm:$0xf]
      %v273 = vld [vmem:[%s166 + $0x188] sm:$0xf]
      %v274 = vld [vmem:[%s166 + $0x18c] sm:$0xf]
      %v275 = vld [vmem:[%s166 + $0x190] sm:$0xf]
      %v276 = vld [vmem:[%s166 + $0x194] sm:$0xf]
      %v277 = vld [vmem:[%s166 + $0x198] sm:$0xf]
      %v278 = vld [vmem:[%s166 + $0x19c] sm:$0xf]
      %v279 = vld [vmem:[%s166 + $0x1a0] sm:$0xf]
      %v280 = vld [vmem:[%s166 + $0x1a4] sm:$0xf]
      %v281 = vld [vmem:[%s166 + $0x1a8] sm:$0xf]
      %v282 = vld [vmem:[%s166 + $0x1ac] sm:$0xf]
      %v283 = vld [vmem:[%s166 + $0x1b0] sm:$0xf]
      %v284 = vld [vmem:[%s166 + $0x1b4] sm:$0xf]
      %v285 = vld [vmem:[%s166 + $0x1b8] sm:$0xf]
      %v286 = vld [vmem:[%s166 + $0x1bc] sm:$0xf]
      %v287 = vld [vmem:[%s166 + $0x1c0] sm:$0xf]
      %v288 = vld [vmem:[%s166 + $0x1c4] sm:$0xf]
      %v289 = vld [vmem:[%s166 + $0x1c8] sm:$0xf]
      %v290 = vld [vmem:[%s166 + $0x1cc] sm:$0xf]
      %v291 = vld [vmem:[%s166 + $0x1d0] sm:$0xf]
      %v292 = vld [vmem:[%s166 + $0x1d4] sm:$0xf]
      %v293 = vld [vmem:[%s166 + $0x1d8] sm:$0xf]
      %v294 = vld [vmem:[%s166 + $0x1dc] sm:$0xf]
      %v295 = vld [vmem:[%s166 + $0x1e0] sm:$0xf]
      %v296 = vld [vmem:[%s166 + $0x1e4] sm:$0xf]
      %v297 = vld [vmem:[%s166 + $0x1e8] sm:$0xf]
      %v298 = vld [vmem:[%s166 + $0x1ec] sm:$0xf]
      %v299 = vld [vmem:[%s166 + $0x1f0] sm:$0xf]
      %v300 = vld [vmem:[%s166 + $0x1f4] sm:$0xf]
      %v301 = vld [vmem:[%s166 + $0x1f8] sm:$0xf]
      %v302 = vld [vmem:[%s166 + $0x1fc] sm:$0xf]
      %v303 = vld [vmem:[%s1] sm:$0xf]
      %v304 = vld [vmem:[%s1 + $0x4] sm:$0xf]
      %v305 = vld [vmem:[%s1 + $0x8] sm:$0xf]
      %v306 = vld [vmem:[%s1 + $0xc] sm:$0x3]
      %v307 = vld [vmem:[%s2] sm:$0x1]
      %v309 = vlaneseq
      %v310 = vshrl.u32 %v309, 7
      %v311 = vsub.s32 0, %v310
      %v312 = vrot.slane %v307, %v311
      %v442 = vunpack.c.l.b16 %v175
      %v443 = vunpack.c.l.b16 %v176
      %v444 = vunpack.c.l.b16 %v177
      %v445 = vunpack.c.l.b16 %v178
      %v446 = vunpack.c.l.b16 %v179
      %v447 = vunpack.c.l.b16 %v180
      %v448 = vunpack.c.l.b16 %v181
      %v449 = vunpack.c.l.b16 %v182
      %v450 = vunpack.c.l.b16 %v183
      %v451 = vunpack.c.l.b16 %v184
      %v452 = vunpack.c.l.b16 %v185
      %v453 = vunpack.c.l.b16 %v186
      %v454 = vunpack.c.l.b16 %v187
      %v455 = vunpack.c.l.b16 %v188
      %v456 = vunpack.c.l.b16 %v189
      %v457 = vunpack.c.l.b16 %v190
      %v458 = vunpack.c.l.b16 %v191
      %v459 = vunpack.c.l.b16 %v192
      %v460 = vunpack.c.l.b16 %v193
      %v461 = vunpack.c.l.b16 %v194
      %v462 = vunpack.c.l.b16 %v195
      %v463 = vunpack.c.l.b16 %v196
      %v464 = vunpack.c.l.b16 %v197
      %v465 = vunpack.c.l.b16 %v198
      %v466 = vunpack.c.l.b16 %v199
      %v467 = vunpack.c.l.b16 %v200
      %v468 = vunpack.c.l.b16 %v201
      %v469 = vunpack.c.l.b16 %v202
      %v470 = vunpack.c.l.b16 %v203
      %v471 = vunpack.c.l.b16 %v204
      %v472 = vunpack.c.l.b16 %v205
      %v473 = vunpack.c.l.b16 %v206
      %v474 = vunpack.c.l.b16 %v207
      %v475 = vunpack.c.l.b16 %v208
      %v476 = vunpack.c.l.b16 %v209
      %v477 = vunpack.c.l.b16 %v210
      %v478 = vunpack.c.l.b16 %v211
      %v479 = vunpack.c.l.b16 %v212
      %v480 = vunpack.c.l.b16 %v213
      %v481 = vunpack.c.l.b16 %v214
      %v482 = vunpack.c.l.b16 %v215
      %v483 = vunpack.c.l.b16 %v216
      %v484 = vunpack.c.l.b16 %v217
      %v485 = vunpack.c.l.b16 %v218
      %v486 = vunpack.c.l.b16 %v219
      %v487 = vunpack.c.l.b16 %v220
      %v488 = vunpack.c.l.b16 %v221
      %v489 = vunpack.c.l.b16 %v222
      %v490 = vunpack.c.l.b16 %v223
      %v491 = vunpack.c.l.b16 %v224
      %v492 = vunpack.c.l.b16 %v225
      %v493 = vunpack.c.l.b16 %v226
      %v494 = vunpack.c.l.b16 %v227
      %v495 = vunpack.c.l.b16 %v228
      %v496 = vunpack.c.l.b16 %v229
      %v497 = vunpack.c.l.b16 %v230
      %v498 = vunpack.c.l.b16 %v231
      %v499 = vunpack.c.l.b16 %v232
      %v500 = vunpack.c.l.b16 %v233
      %v501 = vunpack.c.l.b16 %v234
      %v502 = vunpack.c.l.b16 %v235
      %v503 = vunpack.c.l.b16 %v236
      %v504 = vunpack.c.l.b16 %v237
      %v505 = vunpack.c.l.b16 %v238
      %v506 = vunpack.c.l.b16 %v239
      %v507 = vunpack.c.l.b16 %v240
      %v508 = vunpack.c.l.b16 %v241
      %v509 = vunpack.c.l.b16 %v242
      %v510 = vunpack.c.l.b16 %v243
      %v511 = vunpack.c.l.b16 %v244
      %v512 = vunpack.c.l.b16 %v245
      %v513 = vunpack.c.l.b16 %v246
      %v514 = vunpack.c.l.b16 %v247
      %v515 = vunpack.c.l.b16 %v248
      %v516 = vunpack.c.l.b16 %v249
      %v517 = vunpack.c.l.b16 %v250
      %v518 = vunpack.c.l.b16 %v251
      %v519 = vunpack.c.l.b16 %v252
      %v520 = vunpack.c.l.b16 %v253
      %v521 = vunpack.c.l.b16 %v254
      %v522 = vunpack.c.l.b16 %v255
      %v523 = vunpack.c.l.b16 %v256
      %v524 = vunpack.c.l.b16 %v257
      %v525 = vunpack.c.l.b16 %v258
      %v526 = vunpack.c.l.b16 %v259
      %v527 = vunpack.c.l.b16 %v260
      %v528 = vunpack.c.l.b16 %v261
      %v529 = vunpack.c.l.b16 %v262
      %v530 = vunpack.c.l.b16 %v263
      %v531 = vunpack.c.l.b16 %v264
      %v532 = vunpack.c.l.b16 %v265
      %v533 = vunpack.c.l.b16 %v266
      %v534 = vunpack.c.l.b16 %v267
      %v535 = vunpack.c.l.b16 %v268
      %v536 = vunpack.c.l.b16 %v269
      %v537 = vunpack.c.l.b16 %v270
      %v538 = vunpack.c.l.b16 %v271
      %v539 = vunpack.c.l.b16 %v272
      %v540 = vunpack.c.l.b16 %v273
      %v541 = vunpack.c.l.b16 %v274
      %v542 = vunpack.c.l.b16 %v275
      %v543 = vunpack.c.l.b16 %v276
      %v544 = vunpack.c.l.b16 %v277
      %v545 = vunpack.c.l.b16 %v278
      %v546 = vunpack.c.l.b16 %v279
      %v547 = vunpack.c.l.b16 %v280
      %v548 = vunpack.c.l.b16 %v281
      %v549 = vunpack.c.l.b16 %v282
      %v550 = vunpack.c.l.b16 %v283
      %v551 = vunpack.c.l.b16 %v284
      %v552 = vunpack.c.l.b16 %v285
      %v553 = vunpack.c.l.b16 %v286
      %v554 = vunpack.c.l.b16 %v287
      %v555 = vunpack.c.l.b16 %v288
      %v556 = vunpack.c.l.b16 %v289
      %v557 = vunpack.c.l.b16 %v290
      %v558 = vunpack.c.l.b16 %v291
      %v559 = vunpack.c.l.b16 %v292
      %v560 = vunpack.c.l.b16 %v293
      %v561 = vunpack.c.l.b16 %v294
      %v562 = vunpack.c.l.b16 %v295
      %v563 = vunpack.c.l.b16 %v296
      %v564 = vunpack.c.l.b16 %v297
      %v565 = vunpack.c.l.b16 %v298
      %v566 = vunpack.c.l.b16 %v299
      %v567 = vunpack.c.l.b16 %v300
      %v568 = vunpack.c.l.b16 %v301
      %v569 = vunpack.c.l.b16 %v302
      %v570 = vpack.c.b16 %v443, %v442
      %v571 = vpack.c.b16 %v445, %v444
      %v572 = vpack.c.b16 %v447, %v446
      %v573 = vpack.c.b16 %v449, %v448
      %v574 = vpack.c.b16 %v451, %v450
      %v575 = vpack.c.b16 %v453, %v452
      %v576 = vpack.c.b16 %v455, %v454
      %v577 = vpack.c.b16 %v457, %v456
      %v578 = vpack.c.b16 %v459, %v458
      %v579 = vpack.c.b16 %v461, %v460
      %v580 = vpack.c.b16 %v463, %v462
      %v581 = vpack.c.b16 %v465, %v464
      %v582 = vpack.c.b16 %v467, %v466
      %v583 = vpack.c.b16 %v469, %v468
      %v584 = vpack.c.b16 %v471, %v470
      %v585 = vpack.c.b16 %v473, %v472
      %v586 = vpack.c.b16 %v475, %v474
      %v587 = vpack.c.b16 %v477, %v476
      %v588 = vpack.c.b16 %v479, %v478
      %v589 = vpack.c.b16 %v481, %v480
      %v590 = vpack.c.b16 %v483, %v482
      %v591 = vpack.c.b16 %v485, %v484
      %v592 = vpack.c.b16 %v487, %v486
      %v593 = vpack.c.b16 %v489, %v488
      %v594 = vpack.c.b16 %v491, %v490
      %v595 = vpack.c.b16 %v493, %v492
      %v596 = vpack.c.b16 %v495, %v494
      %v597 = vpack.c.b16 %v497, %v496
      %v598 = vpack.c.b16 %v499, %v498
      %v599 = vpack.c.b16 %v501, %v500
      %v600 = vpack.c.b16 %v503, %v502
      %v601 = vpack.c.b16 %v505, %v504
      %v602 = vpack.c.b16 %v507, %v506
      %v603 = vpack.c.b16 %v509, %v508
      %v604 = vpack.c.b16 %v511, %v510
      %v605 = vpack.c.b16 %v513, %v512
      %v606 = vpack.c.b16 %v515, %v514
      %v607 = vpack.c.b16 %v517, %v516
      %v608 = vpack.c.b16 %v519, %v518
      %v609 = vpack.c.b16 %v521, %v520
      %v610 = vpack.c.b16 %v523, %v522
      %v611 = vpack.c.b16 %v525, %v524
      %v612 = vpack.c.b16 %v527, %v526
      %v613 = vpack.c.b16 %v529, %v528
      %v614 = vpack.c.b16 %v531, %v530
      %v615 = vpack.c.b16 %v533, %v532
      %v616 = vpack.c.b16 %v535, %v534
      %v617 = vpack.c.b16 %v537, %v536
      %v618 = vpack.c.b16 %v539, %v538
      %v619 = vpack.c.b16 %v541, %v540
      %v620 = vpack.c.b16 %v543, %v542
      %v621 = vpack.c.b16 %v545, %v544
      %v622 = vpack.c.b16 %v547, %v546
      %v623 = vpack.c.b16 %v549, %v548
      %v624 = vpack.c.b16 %v551, %v550
      %v625 = vpack.c.b16 %v553, %v552
      %v626 = vpack.c.b16 %v555, %v554
      %v627 = vpack.c.b16 %v557, %v556
      %v628 = vpack.c.b16 %v559, %v558
      %v629 = vpack.c.b16 %v561, %v560
      %v630 = vpack.c.b16 %v563, %v562
      %v631 = vpack.c.b16 %v565, %v564
      %v632 = vpack.c.b16 %v567, %v566
      %v633 = vpack.c.b16 %v569, %v568
      %v638 = vunpack.c.l.b16 %v303
      %v639 = vunpack.c.l.b16 %v304
      %v640 = vunpack.c.l.b16 %v305
      %v641 = vunpack.c.l.b16 %v306
      %v642 = vpack.c.b16 %v639, %v638
      %v643 = vpack.c.b16 %v641, %v640
      %vm645 = vcmask 220160
      %v647 = vsel %vm645, %v570, 0
      %v650 = vsel %vm645, %v571, 0
      %v653 = vsel %vm645, %v572, 0
      %v656 = vsel %vm645, %v573, 0
      %v659 = vsel %vm645, %v574, 0
      %v662 = vsel %vm645, %v575, 0
      %v665 = vsel %vm645, %v576, 0
      %v668 = vsel %vm645, %v577, 0
      %v671 = vsel %vm645, %v578, 0
      %v674 = vsel %vm645, %v579, 0
      %v677 = vsel %vm645, %v580, 0
      %v680 = vsel %vm645, %v581, 0
      %v683 = vsel %vm645, %v582, 0
      %v686 = vsel %vm645, %v583, 0
      %v689 = vsel %vm645, %v584, 0
      %v692 = vsel %vm645, %v585, 0
      %v695 = vsel %vm645, %v586, 0
      %v698 = vsel %vm645, %v587, 0
      %v701 = vsel %vm645, %v588, 0
      %v704 = vsel %vm645, %v589, 0
      %v707 = vsel %vm645, %v590, 0
      %v710 = vsel %vm645, %v591, 0
      %v713 = vsel %vm645, %v592, 0
      %v716 = vsel %vm645, %v593, 0
      %v719 = vsel %vm645, %v594, 0
      %v722 = vsel %vm645, %v595, 0
      %v725 = vsel %vm645, %v596, 0
      %v728 = vsel %vm645, %v597, 0
      %v731 = vsel %vm645, %v598, 0
      %v734 = vsel %vm645, %v599, 0
      %v737 = vsel %vm645, %v600, 0
      %v740 = vsel %vm645, %v601, 0
      %v743 = vsel %vm645, %v602, 0
      %v746 = vsel %vm645, %v603, 0
      %v749 = vsel %vm645, %v604, 0
      %v752 = vsel %vm645, %v605, 0
      %v755 = vsel %vm645, %v606, 0
      %v758 = vsel %vm645, %v607, 0
      %v761 = vsel %vm645, %v608, 0
      %v764 = vsel %vm645, %v609, 0
      %v767 = vsel %vm645, %v610, 0
      %v770 = vsel %vm645, %v611, 0
      %v773 = vsel %vm645, %v612, 0
      %v776 = vsel %vm645, %v613, 0
      %v779 = vsel %vm645, %v614, 0
      %v782 = vsel %vm645, %v615, 0
      %v785 = vsel %vm645, %v616, 0
      %v788 = vsel %vm645, %v617, 0
      %v791 = vsel %vm645, %v618, 0
      %v794 = vsel %vm645, %v619, 0
      %v797 = vsel %vm645, %v620, 0
      %v800 = vsel %vm645, %v621, 0
      %v803 = vsel %vm645, %v622, 0
      %v806 = vsel %vm645, %v623, 0
      %v809 = vsel %vm645, %v624, 0
      %v812 = vsel %vm645, %v625, 0
      %v815 = vsel %vm645, %v626, 0
      %v818 = vsel %vm645, %v627, 0
      %v821 = vsel %vm645, %v628, 0
      %v824 = vsel %vm645, %v629, 0
      %v827 = vsel %vm645, %v630, 0
      %v830 = vsel %vm645, %v631, 0
      %v833 = vsel %vm645, %v632, 0
      %v836 = vsel %vm645, %v633, 0
      %vm838 = vcmask 1044480
      %vm839 = vcmask 1045504
      %v840 = vsel %vm838, 4294967295, 65535
      %v841 = vsel %vm839, %v840, 0
      %v843 = vand.u32 %v643, %v841
      %845 = vmatprep.subr.bf16.mxu0 0
      %846 = vmatpush1.bf16.msra.mxu0 0
      %847 = vmatprep.subr.bf16.mxu0 0
      %848 = vmatpush1.bf16.msra.mxu0 0
      %849 = vmatprep.subr.bf16.mxu0 0
      %850 = vmatpush1.bf16.msra.mxu0 0
      %851 = vmatprep.subr.bf16.mxu0 0
      %852 = vmatpush1.bf16.msra.mxu0 0
      %853 = vmatprep.subr.bf16.mxu0 0
      %854 = vmatpush1.bf16.msra.mxu0 0
      %855 = vmatprep.subr.bf16.mxu0 0
      %856 = vmatpush1.bf16.msra.mxu0 0
      %857 = vmatprep.subr.bf16.mxu0 0
      %858 = vmatpush1.bf16.msra.mxu0 %v843
      %859 = vmatprep.subr.bf16.mxu0 0
      %860 = vmatpush1.bf16.msra.mxu0 %v642
      %861 = vmatprep.subr.bf16.mxu0 0
      %862 = vmatpush2.bf16.msra.mxu0 0
      %863 = vmatprep.subr.bf16.mxu0 0
      %864 = vmatpush2.bf16.msra.mxu0 0
      %865 = vmatprep.subr.bf16.mxu0 0
      %866 = vmatpush2.bf16.msra.mxu0 0
      %867 = vmatprep.subr.bf16.mxu0 0
      %868 = vmatpush2.bf16.msra.mxu0 0
      %869 = vmatprep.subr.bf16.mxu0 0
      %870 = vmatpush2.bf16.msra.mxu0 0
      %871 = vmatprep.subr.bf16.mxu0 0
      %872 = vmatpush2.bf16.msra.mxu0 0
      %873 = vmatprep.subr.bf16.mxu0 0
      %874 = vmatpush2.bf16.msra.mxu0 0
      %875 = vmatprep.subr.bf16.mxu0 0
      %876 = vmatpush2.bf16.msra.mxu0 0
      %877 = vmatprep.mubr.bf16.mxu0 0
      %878 = vmatmul.mubr.bf16.gmra.mxu0 %v647
      %v879 = vpop.f32.mrf.mxu0
      %v880 = vadd.f32 %v312, %v879
      %v881 = vpop.f32.mrf.mxu0
      %v882 = vpop.f32.mrf.mxu0
      %v883 = vadd.f32 %v312, %v882
      %v884 = vpop.f32.mrf.mxu0
      %885 = vmatprep.mubr.bf16.mxu0 0
      %886 = vmatmul.mubr.bf16.gmra.mxu0 %v650
      %v887 = vpop.f32.mrf.mxu0
      %v888 = vadd.f32 %v312, %v887
      %v889 = vpop.f32.mrf.mxu0
      %v890 = vpop.f32.mrf.mxu0
      %v891 = vadd.f32 %v312, %v890
      %v892 = vpop.f32.mrf.mxu0
      %893 = vmatprep.mubr.bf16.mxu0 0
      %894 = vmatmul.mubr.bf16.gmra.mxu0 %v653
      %v895 = vpop.f32.mrf.mxu0
      %v896 = vadd.f32 %v312, %v895
      %v897 = vpop.f32.mrf.mxu0
      %v898 = vpop.f32.mrf.mxu0
      %v899 = vadd.f32 %v312, %v898
      %v900 = vpop.f32.mrf.mxu0
      %901 = vmatprep.mubr.bf16.mxu0 0
      %902 = vmatmul.mubr.bf16.gmra.mxu0 %v656
      %v903 = vpop.f32.mrf.mxu0
      %v904 = vadd.f32 %v312, %v903
      %v905 = vpop.f32.mrf.mxu0
      %v906 = vpop.f32.mrf.mxu0
      %v907 = vadd.f32 %v312, %v906
      %v908 = vpop.f32.mrf.mxu0
      %909 = vmatprep.mubr.bf16.mxu0 0
      %910 = vmatmul.mubr.bf16.gmra.mxu0 %v659
      %v911 = vpop.f32.mrf.mxu0
      %v912 = vadd.f32 %v312, %v911
      %v913 = vpop.f32.mrf.mxu0
      %v914 = vpop.f32.mrf.mxu0
      %v915 = vadd.f32 %v312, %v914
      %v916 = vpop.f32.mrf.mxu0
      %917 = vmatprep.mubr.bf16.mxu0 0
      %918 = vmatmul.mubr.bf16.gmra.mxu0 %v662
      %v919 = vpop.f32.mrf.mxu0
      %v920 = vadd.f32 %v312, %v919
      %v921 = vpop.f32.mrf.mxu0
      %v922 = vpop.f32.mrf.mxu0
      %v923 = vadd.f32 %v312, %v922
      %v924 = vpop.f32.mrf.mxu0
      %925 = vmatprep.mubr.bf16.mxu0 0
      %926 = vmatmul.mubr.bf16.gmra.mxu0 %v665
      %v927 = vpop.f32.mrf.mxu0
      %v928 = vadd.f32 %v312, %v927
      %v929 = vpop.f32.mrf.mxu0
      %v930 = vpop.f32.mrf.mxu0
      %v931 = vadd.f32 %v312, %v930
      %v932 = vpop.f32.mrf.mxu0
      %933 = vmatprep.mubr.bf16.mxu0 0
      %934 = vmatmul.mubr.bf16.gmra.mxu0 %v668
      %v935 = vpop.f32.mrf.mxu0
      %v936 = vadd.f32 %v312, %v935
      %v937 = vpop.f32.mrf.mxu0
      %v938 = vpop.f32.mrf.mxu0
      %v939 = vadd.f32 %v312, %v938
      %v940 = vpop.f32.mrf.mxu0
      %941 = vmatprep.mubr.bf16.mxu0 0
      %942 = vmatmul.mubr.bf16.gmra.mxu0 %v671
      %v943 = vpop.f32.mrf.mxu0
      %v944 = vadd.f32 %v312, %v943
      %v945 = vpop.f32.mrf.mxu0
      %v946 = vpop.f32.mrf.mxu0
      %v947 = vadd.f32 %v312, %v946
      %v948 = vpop.f32.mrf.mxu0
      %949 = vmatprep.mubr.bf16.mxu0 0
      %950 = vmatmul.mubr.bf16.gmra.mxu0 %v674
      %v951 = vpop.f32.mrf.mxu0
      %v952 = vadd.f32 %v312, %v951
      %v953 = vpop.f32.mrf.mxu0
      %v954 = vpop.f32.mrf.mxu0
      %v955 = vadd.f32 %v312, %v954
      %v956 = vpop.f32.mrf.mxu0
      %957 = vmatprep.mubr.bf16.mxu0 0
      %958 = vmatmul.mubr.bf16.gmra.mxu0 %v677
      %v959 = vpop.f32.mrf.mxu0
      %v960 = vadd.f32 %v312, %v959
      %v961 = vpop.f32.mrf.mxu0
      %v962 = vpop.f32.mrf.mxu0
      %v963 = vadd.f32 %v312, %v962
      %v964 = vpop.f32.mrf.mxu0
      %965 = vmatprep.mubr.bf16.mxu0 0
      %966 = vmatmul.mubr.bf16.gmra.mxu0 %v680
      %v967 = vpop.f32.mrf.mxu0
      %v968 = vadd.f32 %v312, %v967
      %v969 = vpop.f32.mrf.mxu0
      %v970 = vpop.f32.mrf.mxu0
      %v971 = vadd.f32 %v312, %v970
      %v972 = vpop.f32.mrf.mxu0
      %973 = vmatprep.mubr.bf16.mxu0 0
      %974 = vmatmul.mubr.bf16.gmra.mxu0 %v683
      %v975 = vpop.f32.mrf.mxu0
      %v976 = vadd.f32 %v312, %v975
      %v977 = vpop.f32.mrf.mxu0
      %v978 = vpop.f32.mrf.mxu0
      %v979 = vadd.f32 %v312, %v978
      %v980 = vpop.f32.mrf.mxu0
      %981 = vmatprep.mubr.bf16.mxu0 0
      %982 = vmatmul.mubr.bf16.gmra.mxu0 %v686
      %v983 = vpop.f32.mrf.mxu0
      %v984 = vadd.f32 %v312, %v983
      %v985 = vpop.f32.mrf.mxu0
      %v986 = vpop.f32.mrf.mxu0
      %v987 = vadd.f32 %v312, %v986
      %v988 = vpop.f32.mrf.mxu0
      %989 = vmatprep.mubr.bf16.mxu0 0
      %990 = vmatmul.mubr.bf16.gmra.mxu0 %v689
      %v991 = vpop.f32.mrf.mxu0
      %v992 = vadd.f32 %v312, %v991
      %v993 = vpop.f32.mrf.mxu0
      %v994 = vpop.f32.mrf.mxu0
      %v995 = vadd.f32 %v312, %v994
      %v996 = vpop.f32.mrf.mxu0
      %997 = vmatprep.mubr.bf16.mxu0 0
      %998 = vmatmul.mubr.bf16.gmra.mxu0 %v692
      %v999 = vpop.f32.mrf.mxu0
      %v1000 = vadd.f32 %v312, %v999
      %v1001 = vpop.f32.mrf.mxu0
      %v1002 = vpop.f32.mrf.mxu0
      %v1003 = vadd.f32 %v312, %v1002
      %v1004 = vpop.f32.mrf.mxu0
      %1005 = vmatprep.mubr.bf16.mxu0 0
      %1006 = vmatmul.mubr.bf16.gmra.mxu0 %v695
      %v1007 = vpop.f32.mrf.mxu0
      %v1008 = vadd.f32 %v312, %v1007
      %v1009 = vpop.f32.mrf.mxu0
      %v1010 = vpop.f32.mrf.mxu0
      %v1011 = vadd.f32 %v312, %v1010
      %v1012 = vpop.f32.mrf.mxu0
      %1013 = vmatprep.mubr.bf16.mxu0 0
      %1014 = vmatmul.mubr.bf16.gmra.mxu0 %v698
      %v1015 = vpop.f32.mrf.mxu0
      %v1016 = vadd.f32 %v312, %v1015
      %v1017 = vpop.f32.mrf.mxu0
      %v1018 = vpop.f32.mrf.mxu0
      %v1019 = vadd.f32 %v312, %v1018
      %v1020 = vpop.f32.mrf.mxu0
      %1021 = vmatprep.mubr.bf16.mxu0 0
      %1022 = vmatmul.mubr.bf16.gmra.mxu0 %v701
      %v1023 = vpop.f32.mrf.mxu0
      %v1024 = vadd.f32 %v312, %v1023
      %v1025 = vpop.f32.mrf.mxu0
      %v1026 = vpop.f32.mrf.mxu0
      %v1027 = vadd.f32 %v312, %v1026
      %v1028 = vpop.f32.mrf.mxu0
      %1029 = vmatprep.mubr.bf16.mxu0 0
      %1030 = vmatmul.mubr.bf16.gmra.mxu0 %v704
      %v1031 = vpop.f32.mrf.mxu0
      %v1032 = vadd.f32 %v312, %v1031
      %v1033 = vpop.f32.mrf.mxu0
      %v1034 = vpop.f32.mrf.mxu0
      %v1035 = vadd.f32 %v312, %v1034
      %v1036 = vpop.f32.mrf.mxu0
      %1037 = vmatprep.mubr.bf16.mxu0 0
      %1038 = vmatmul.mubr.bf16.gmra.mxu0 %v707
      %v1039 = vpop.f32.mrf.mxu0
      %v1040 = vadd.f32 %v312, %v1039
      %v1041 = vpop.f32.mrf.mxu0
      %v1042 = vpop.f32.mrf.mxu0
      %v1043 = vadd.f32 %v312, %v1042
      %v1044 = vpop.f32.mrf.mxu0
      %1045 = vmatprep.mubr.bf16.mxu0 0
      %1046 = vmatmul.mubr.bf16.gmra.mxu0 %v710
      %v1047 = vpop.f32.mrf.mxu0
      %v1048 = vadd.f32 %v312, %v1047
      %v1049 = vpop.f32.mrf.mxu0
      %v1050 = vpop.f32.mrf.mxu0
      %v1051 = vadd.f32 %v312, %v1050
      %v1052 = vpop.f32.mrf.mxu0
      %1053 = vmatprep.mubr.bf16.mxu0 0
      %1054 = vmatmul.mubr.bf16.gmra.mxu0 %v713
      %v1055 = vpop.f32.mrf.mxu0
      %v1056 = vadd.f32 %v312, %v1055
      %v1057 = vpop.f32.mrf.mxu0
      %v1058 = vpop.f32.mrf.mxu0
      %v1059 = vadd.f32 %v312, %v1058
      %v1060 = vpop.f32.mrf.mxu0
      %1061 = vmatprep.mubr.bf16.mxu0 0
      %1062 = vmatmul.mubr.bf16.gmra.mxu0 %v716
      %v1063 = vpop.f32.mrf.mxu0
      %v1064 = vadd.f32 %v312, %v1063
      %v1065 = vpop.f32.mrf.mxu0
      %v1066 = vpop.f32.mrf.mxu0
      %v1067 = vadd.f32 %v312, %v1066
      %v1068 = vpop.f32.mrf.mxu0
      %1069 = vmatprep.mubr.bf16.mxu0 0
      %1070 = vmatmul.mubr.bf16.gmra.mxu0 %v719
      %v1071 = vpop.f32.mrf.mxu0
      %v1072 = vadd.f32 %v312, %v1071
      %v1073 = vpop.f32.mrf.mxu0
      %v1074 = vpop.f32.mrf.mxu0
      %v1075 = vadd.f32 %v312, %v1074
      %v1076 = vpop.f32.mrf.mxu0
      %1077 = vmatprep.mubr.bf16.mxu0 0
      %1078 = vmatmul.mubr.bf16.gmra.mxu0 %v722
      %v1079 = vpop.f32.mrf.mxu0
      %v1080 = vadd.f32 %v312, %v1079
      %v1081 = vpop.f32.mrf.mxu0
      %v1082 = vpop.f32.mrf.mxu0
      %v1083 = vadd.f32 %v312, %v1082
      %v1084 = vpop.f32.mrf.mxu0
      %1085 = vmatprep.mubr.bf16.mxu0 0
      %1086 = vmatmul.mubr.bf16.gmra.mxu0 %v725
      %v1087 = vpop.f32.mrf.mxu0
      %v1088 = vadd.f32 %v312, %v1087
      %v1089 = vpop.f32.mrf.mxu0
      %v1090 = vpop.f32.mrf.mxu0
      %v1091 = vadd.f32 %v312, %v1090
      %v1092 = vpop.f32.mrf.mxu0
      %1093 = vmatprep.mubr.bf16.mxu0 0
      %1094 = vmatmul.mubr.bf16.gmra.mxu0 %v728
      %v1095 = vpop.f32.mrf.mxu0
      %v1096 = vadd.f32 %v312, %v1095
      %v1097 = vpop.f32.mrf.mxu0
      %v1098 = vpop.f32.mrf.mxu0
      %v1099 = vadd.f32 %v312, %v1098
      %v1100 = vpop.f32.mrf.mxu0
      %1101 = vmatprep.mubr.bf16.mxu0 0
      %1102 = vmatmul.mubr.bf16.gmra.mxu0 %v731
      %v1103 = vpop.f32.mrf.mxu0
      %v1104 = vadd.f32 %v312, %v1103
      %v1105 = vpop.f32.mrf.mxu0
      %v1106 = vpop.f32.mrf.mxu0
      %v1107 = vadd.f32 %v312, %v1106
      %v1108 = vpop.f32.mrf.mxu0
      %1109 = vmatprep.mubr.bf16.mxu0 0
      %1110 = vmatmul.mubr.bf16.gmra.mxu0 %v734
      %v1111 = vpop.f32.mrf.mxu0
      %v1112 = vadd.f32 %v312, %v1111
      %v1113 = vpop.f32.mrf.mxu0
      %v1114 = vpop.f32.mrf.mxu0
      %v1115 = vadd.f32 %v312, %v1114
      %v1116 = vpop.f32.mrf.mxu0
      %1117 = vmatprep.mubr.bf16.mxu0 0
      %1118 = vmatmul.mubr.bf16.gmra.mxu0 %v737
      %v1119 = vpop.f32.mrf.mxu0
      %v1120 = vadd.f32 %v312, %v1119
      %v1121 = vpop.f32.mrf.mxu0
      %v1122 = vpop.f32.mrf.mxu0
      %v1123 = vadd.f32 %v312, %v1122
      %v1124 = vpop.f32.mrf.mxu0
      %1125 = vmatprep.mubr.bf16.mxu0 0
      %1126 = vmatmul.mubr.bf16.gmra.mxu0 %v740
      %v1127 = vpop.f32.mrf.mxu0
      %v1128 = vadd.f32 %v312, %v1127
      %v1129 = vpop.f32.mrf.mxu0
      %v1130 = vpop.f32.mrf.mxu0
      %v1131 = vadd.f32 %v312, %v1130
      %v1132 = vpop.f32.mrf.mxu0
      %1133 = vmatprep.mubr.bf16.mxu0 0
      %1134 = vmatmul.mubr.bf16.gmra.mxu0 %v743
      %v1135 = vpop.f32.mrf.mxu0
      %v1136 = vadd.f32 %v312, %v1135
      %v1137 = vpop.f32.mrf.mxu0
      %v1138 = vpop.f32.mrf.mxu0
      %v1139 = vadd.f32 %v312, %v1138
      %v1140 = vpop.f32.mrf.mxu0
      %1141 = vmatprep.mubr.bf16.mxu0 0
      %1142 = vmatmul.mubr.bf16.gmra.mxu0 %v746
      %v1143 = vpop.f32.mrf.mxu0
      %v1144 = vadd.f32 %v312, %v1143
      %v1145 = vpop.f32.mrf.mxu0
      %v1146 = vpop.f32.mrf.mxu0
      %v1147 = vadd.f32 %v312, %v1146
      %v1148 = vpop.f32.mrf.mxu0
      %1149 = vmatprep.mubr.bf16.mxu0 0
      %1150 = vmatmul.mubr.bf16.gmra.mxu0 %v749
      %v1151 = vpop.f32.mrf.mxu0
      %v1152 = vadd.f32 %v312, %v1151
      %v1153 = vpop.f32.mrf.mxu0
      %v1154 = vpop.f32.mrf.mxu0
      %v1155 = vadd.f32 %v312, %v1154
      %v1156 = vpop.f32.mrf.mxu0
      %1157 = vmatprep.mubr.bf16.mxu0 0
      %1158 = vmatmul.mubr.bf16.gmra.mxu0 %v752
      %v1159 = vpop.f32.mrf.mxu0
      %v1160 = vadd.f32 %v312, %v1159
      %v1161 = vpop.f32.mrf.mxu0
      %v1162 = vpop.f32.mrf.mxu0
      %v1163 = vadd.f32 %v312, %v1162
      %v1164 = vpop.f32.mrf.mxu0
      %1165 = vmatprep.mubr.bf16.mxu0 0
      %1166 = vmatmul.mubr.bf16.gmra.mxu0 %v755
      %v1167 = vpop.f32.mrf.mxu0
      %v1168 = vadd.f32 %v312, %v1167
      %v1169 = vpop.f32.mrf.mxu0
      %v1170 = vpop.f32.mrf.mxu0
      %v1171 = vadd.f32 %v312, %v1170
      %v1172 = vpop.f32.mrf.mxu0
      %1173 = vmatprep.mubr.bf16.mxu0 0
      %1174 = vmatmul.mubr.bf16.gmra.mxu0 %v758
      %v1175 = vpop.f32.mrf.mxu0
      %v1176 = vadd.f32 %v312, %v1175
      %v1177 = vpop.f32.mrf.mxu0
      %v1178 = vpop.f32.mrf.mxu0
      %v1179 = vadd.f32 %v312, %v1178
      %v1180 = vpop.f32.mrf.mxu0
      %1181 = vmatprep.mubr.bf16.mxu0 0
      %1182 = vmatmul.mubr.bf16.gmra.mxu0 %v761
      %v1183 = vpop.f32.mrf.mxu0
      %v1184 = vadd.f32 %v312, %v1183
      %v1185 = vpop.f32.mrf.mxu0
      %v1186 = vpop.f32.mrf.mxu0
      %v1187 = vadd.f32 %v312, %v1186
      %v1188 = vpop.f32.mrf.mxu0
      %1189 = vmatprep.mubr.bf16.mxu0 0
      %1190 = vmatmul.mubr.bf16.gmra.mxu0 %v764
      %v1191 = vpop.f32.mrf.mxu0
      %v1192 = vadd.f32 %v312, %v1191
      %v1193 = vpop.f32.mrf.mxu0
      %v1194 = vpop.f32.mrf.mxu0
      %v1195 = vadd.f32 %v312, %v1194
      %v1196 = vpop.f32.mrf.mxu0
      %1197 = vmatprep.mubr.bf16.mxu0 0
      %1198 = vmatmul.mubr.bf16.gmra.mxu0 %v767
      %v1199 = vpop.f32.mrf.mxu0
      %v1200 = vadd.f32 %v312, %v1199
      %v1201 = vpop.f32.mrf.mxu0
      %v1202 = vpop.f32.mrf.mxu0
      %v1203 = vadd.f32 %v312, %v1202
      %v1204 = vpop.f32.mrf.mxu0
      %1205 = vmatprep.mubr.bf16.mxu0 0
      %1206 = vmatmul.mubr.bf16.gmra.mxu0 %v770
      %v1207 = vpop.f32.mrf.mxu0
      %v1208 = vadd.f32 %v312, %v1207
      %v1209 = vpop.f32.mrf.mxu0
      %v1210 = vpop.f32.mrf.mxu0
      %v1211 = vadd.f32 %v312, %v1210
      %v1212 = vpop.f32.mrf.mxu0
      %1213 = vmatprep.mubr.bf16.mxu0 0
      %1214 = vmatmul.mubr.bf16.gmra.mxu0 %v773
      %v1215 = vpop.f32.mrf.mxu0
      %v1216 = vadd.f32 %v312, %v1215
      %v1217 = vpop.f32.mrf.mxu0
      %v1218 = vpop.f32.mrf.mxu0
      %v1219 = vadd.f32 %v312, %v1218
      %v1220 = vpop.f32.mrf.mxu0
      %1221 = vmatprep.mubr.bf16.mxu0 0
      %1222 = vmatmul.mubr.bf16.gmra.mxu0 %v776
      %v1223 = vpop.f32.mrf.mxu0
      %v1224 = vadd.f32 %v312, %v1223
      %v1225 = vpop.f32.mrf.mxu0
      %v1226 = vpop.f32.mrf.mxu0
      %v1227 = vadd.f32 %v312, %v1226
      %v1228 = vpop.f32.mrf.mxu0
      %1229 = vmatprep.mubr.bf16.mxu0 0
      %1230 = vmatmul.mubr.bf16.gmra.mxu0 %v779
      %v1231 = vpop.f32.mrf.mxu0
      %v1232 = vadd.f32 %v312, %v1231
      %v1233 = vpop.f32.mrf.mxu0
      %v1234 = vpop.f32.mrf.mxu0
      %v1235 = vadd.f32 %v312, %v1234
      %v1236 = vpop.f32.mrf.mxu0
      %1237 = vmatprep.mubr.bf16.mxu0 0
      %1238 = vmatmul.mubr.bf16.gmra.mxu0 %v782
      %v1239 = vpop.f32.mrf.mxu0
      %v1240 = vadd.f32 %v312, %v1239
      %v1241 = vpop.f32.mrf.mxu0
      %v1242 = vpop.f32.mrf.mxu0
      %v1243 = vadd.f32 %v312, %v1242
      %v1244 = vpop.f32.mrf.mxu0
      %1245 = vmatprep.mubr.bf16.mxu0 0
      %1246 = vmatmul.mubr.bf16.gmra.mxu0 %v785
      %v1247 = vpop.f32.mrf.mxu0
      %v1248 = vadd.f32 %v312, %v1247
      %v1249 = vpop.f32.mrf.mxu0
      %v1250 = vpop.f32.mrf.mxu0
      %v1251 = vadd.f32 %v312, %v1250
      %v1252 = vpop.f32.mrf.mxu0
      %1253 = vmatprep.mubr.bf16.mxu0 0
      %1254 = vmatmul.mubr.bf16.gmra.mxu0 %v788
      %v1255 = vpop.f32.mrf.mxu0
      %v1256 = vadd.f32 %v312, %v1255
      %v1257 = vpop.f32.mrf.mxu0
      %v1258 = vpop.f32.mrf.mxu0
      %v1259 = vadd.f32 %v312, %v1258
      %v1260 = vpop.f32.mrf.mxu0
      %1261 = vmatprep.mubr.bf16.mxu0 0
      %1262 = vmatmul.mubr.bf16.gmra.mxu0 %v791
      %v1263 = vpop.f32.mrf.mxu0
      %v1264 = vadd.f32 %v312, %v1263
      %v1265 = vpop.f32.mrf.mxu0
      %v1266 = vpop.f32.mrf.mxu0
      %v1267 = vadd.f32 %v312, %v1266
      %v1268 = vpop.f32.mrf.mxu0
      %1269 = vmatprep.mubr.bf16.mxu0 0
      %1270 = vmatmul.mubr.bf16.gmra.mxu0 %v794
      %v1271 = vpop.f32.mrf.mxu0
      %v1272 = vadd.f32 %v312, %v1271
      %v1273 = vpop.f32.mrf.mxu0
      %v1274 = vpop.f32.mrf.mxu0
      %v1275 = vadd.f32 %v312, %v1274
      %v1276 = vpop.f32.mrf.mxu0
      %1277 = vmatprep.mubr.bf16.mxu0 0
      %1278 = vmatmul.mubr.bf16.gmra.mxu0 %v797
      %v1279 = vpop.f32.mrf.mxu0
      %v1280 = vadd.f32 %v312, %v1279
      %v1281 = vpop.f32.mrf.mxu0
      %v1282 = vpop.f32.mrf.mxu0
      %v1283 = vadd.f32 %v312, %v1282
      %v1284 = vpop.f32.mrf.mxu0
      %1285 = vmatprep.mubr.bf16.mxu0 0
      %1286 = vmatmul.mubr.bf16.gmra.mxu0 %v800
      %v1287 = vpop.f32.mrf.mxu0
      %v1288 = vadd.f32 %v312, %v1287
      %v1289 = vpop.f32.mrf.mxu0
      %v1290 = vpop.f32.mrf.mxu0
      %v1291 = vadd.f32 %v312, %v1290
      %v1292 = vpop.f32.mrf.mxu0
      %1293 = vmatprep.mubr.bf16.mxu0 0
      %1294 = vmatmul.mubr.bf16.gmra.mxu0 %v803
      %v1295 = vpop.f32.mrf.mxu0
      %v1296 = vadd.f32 %v312, %v1295
      %v1297 = vpop.f32.mrf.mxu0
      %v1298 = vpop.f32.mrf.mxu0
      %v1299 = vadd.f32 %v312, %v1298
      %v1300 = vpop.f32.mrf.mxu0
      %1301 = vmatprep.mubr.bf16.mxu0 0
      %1302 = vmatmul.mubr.bf16.gmra.mxu0 %v806
      %v1303 = vpop.f32.mrf.mxu0
      %v1304 = vadd.f32 %v312, %v1303
      %v1305 = vpop.f32.mrf.mxu0
      %v1306 = vpop.f32.mrf.mxu0
      %v1307 = vadd.f32 %v312, %v1306
      %v1308 = vpop.f32.mrf.mxu0
      %1309 = vmatprep.mubr.bf16.mxu0 0
      %1310 = vmatmul.mubr.bf16.gmra.mxu0 %v809
      %v1311 = vpop.f32.mrf.mxu0
      %v1312 = vadd.f32 %v312, %v1311
      %v1313 = vpop.f32.mrf.mxu0
      %v1314 = vpop.f32.mrf.mxu0
      %v1315 = vadd.f32 %v312, %v1314
      %v1316 = vpop.f32.mrf.mxu0
      %1317 = vmatprep.mubr.bf16.mxu0 0
      %1318 = vmatmul.mubr.bf16.gmra.mxu0 %v812
      %v1319 = vpop.f32.mrf.mxu0
      %v1320 = vadd.f32 %v312, %v1319
      %v1321 = vpop.f32.mrf.mxu0
      %v1322 = vpop.f32.mrf.mxu0
      %v1323 = vadd.f32 %v312, %v1322
      %v1324 = vpop.f32.mrf.mxu0
      %1325 = vmatprep.mubr.bf16.mxu0 0
      %1326 = vmatmul.mubr.bf16.gmra.mxu0 %v815
      %v1327 = vpop.f32.mrf.mxu0
      %v1328 = vadd.f32 %v312, %v1327
      %v1329 = vpop.f32.mrf.mxu0
      %v1330 = vpop.f32.mrf.mxu0
      %v1331 = vadd.f32 %v312, %v1330
      %v1332 = vpop.f32.mrf.mxu0
      %1333 = vmatprep.mubr.bf16.mxu0 0
      %1334 = vmatmul.mubr.bf16.gmra.mxu0 %v818
      %v1335 = vpop.f32.mrf.mxu0
      %v1336 = vadd.f32 %v312, %v1335
      %v1337 = vpop.f32.mrf.mxu0
      %v1338 = vpop.f32.mrf.mxu0
      %v1339 = vadd.f32 %v312, %v1338
      %v1340 = vpop.f32.mrf.mxu0
      %1341 = vmatprep.mubr.bf16.mxu0 0
      %1342 = vmatmul.mubr.bf16.gmra.mxu0 %v821
      %v1343 = vpop.f32.mrf.mxu0
      %v1344 = vadd.f32 %v312, %v1343
      %v1345 = vpop.f32.mrf.mxu0
      %v1346 = vpop.f32.mrf.mxu0
      %v1347 = vadd.f32 %v312, %v1346
      %v1348 = vpop.f32.mrf.mxu0
      %1349 = vmatprep.mubr.bf16.mxu0 0
      %1350 = vmatmul.mubr.bf16.gmra.mxu0 %v824
      %v1351 = vpop.f32.mrf.mxu0
      %v1352 = vadd.f32 %v312, %v1351
      %v1353 = vpop.f32.mrf.mxu0
      %v1354 = vpop.f32.mrf.mxu0
      %v1355 = vadd.f32 %v312, %v1354
      %v1356 = vpop.f32.mrf.mxu0
      %1357 = vmatprep.mubr.bf16.mxu0 0
      %1358 = vmatmul.mubr.bf16.gmra.mxu0 %v827
      %v1359 = vpop.f32.mrf.mxu0
      %v1360 = vadd.f32 %v312, %v1359
      %v1361 = vpop.f32.mrf.mxu0
      %v1362 = vpop.f32.mrf.mxu0
      %v1363 = vadd.f32 %v312, %v1362
      %v1364 = vpop.f32.mrf.mxu0
      %1365 = vmatprep.mubr.bf16.mxu0 0
      %1366 = vmatmul.mubr.bf16.gmra.mxu0 %v830
      %v1367 = vpop.f32.mrf.mxu0
      %v1368 = vadd.f32 %v312, %v1367
      %v1369 = vpop.f32.mrf.mxu0
      %v1370 = vpop.f32.mrf.mxu0
      %v1371 = vadd.f32 %v312, %v1370
      %v1372 = vpop.f32.mrf.mxu0
      %1373 = vmatprep.mubr.bf16.mxu0 0
      %1374 = vmatmul.mubr.bf16.gmra.mxu0 %v833
      %v1375 = vpop.f32.mrf.mxu0
      %v1376 = vadd.f32 %v312, %v1375
      %v1377 = vpop.f32.mrf.mxu0
      %v1378 = vpop.f32.mrf.mxu0
      %v1379 = vadd.f32 %v312, %v1378
      %v1380 = vpop.f32.mrf.mxu0
      %1381 = vmatprep.mubr.bf16.mxu0 0
      %1382 = vmatmul.mubr.bf16.gmra.mxu0 %v836
      %v1383 = vpop.f32.mrf.mxu0
      %v1384 = vadd.f32 %v312, %v1383
      %v1385 = vpop.f32.mrf.mxu0
      %v1386 = vpop.f32.mrf.mxu0
      %v1387 = vadd.f32 %v312, %v1386
      %v1388 = vpop.f32.mrf.mxu0
      %1389 = vdwg.mxu0
      %v1390 = vmax.f32 %v880, 0.0
      %v1391 = vmax.f32 %v883, 0.0
      %v1392 = vmax.f32 %v888, 0.0
      %v1393 = vmax.f32 %v891, 0.0
      %v1394 = vmax.f32 %v896, 0.0
      %v1395 = vmax.f32 %v899, 0.0
      %v1396 = vmax.f32 %v904, 0.0
      %v1397 = vmax.f32 %v907, 0.0
      %v1398 = vmax.f32 %v912, 0.0
      %v1399 = vmax.f32 %v915, 0.0
      %v1400 = vmax.f32 %v920, 0.0
      %v1401 = vmax.f32 %v923, 0.0
      %v1402 = vmax.f32 %v928, 0.0
      %v1403 = vmax.f32 %v931, 0.0
      %v1404 = vmax.f32 %v936, 0.0
      %v1405 = vmax.f32 %v939, 0.0
      %v1406 = vmax.f32 %v944, 0.0
      %v1407 = vmax.f32 %v947, 0.0
      %v1408 = vmax.f32 %v952, 0.0
      %v1409 = vmax.f32 %v955, 0.0
      %v1410 = vmax.f32 %v960, 0.0
      %v1411 = vmax.f32 %v963, 0.0
      %v1412 = vmax.f32 %v968, 0.0
      %v1413 = vmax.f32 %v971, 0.0
      %v1414 = vmax.f32 %v976, 0.0
      %v1415 = vmax.f32 %v979, 0.0
      %v1416 = vmax.f32 %v984, 0.0
      %v1417 = vmax.f32 %v987, 0.0
      %v1418 = vmax.f32 %v992, 0.0
      %v1419 = vmax.f32 %v995, 0.0
      %v1420 = vmax.f32 %v1000, 0.0
      %v1421 = vmax.f32 %v1003, 0.0
      %v1422 = vmax.f32 %v1008, 0.0
      %v1423 = vmax.f32 %v1011, 0.0
      %v1424 = vmax.f32 %v1016, 0.0
      %v1425 = vmax.f32 %v1019, 0.0
      %v1426 = vmax.f32 %v1024, 0.0
      %v1427 = vmax.f32 %v1027, 0.0
      %v1428 = vmax.f32 %v1032, 0.0
      %v1429 = vmax.f32 %v1035, 0.0
      %v1430 = vmax.f32 %v1040, 0.0
      %v1431 = vmax.f32 %v1043, 0.0
      %v1432 = vmax.f32 %v1048, 0.0
      %v1433 = vmax.f32 %v1051, 0.0
      %v1434 = vmax.f32 %v1056, 0.0
      %v1435 = vmax.f32 %v1059, 0.0
      %v1436 = vmax.f32 %v1064, 0.0
      %v1437 = vmax.f32 %v1067, 0.0
      %v1438 = vmax.f32 %v1072, 0.0
      %v1439 = vmax.f32 %v1075, 0.0
      %v1440 = vmax.f32 %v1080, 0.0
      %v1441 = vmax.f32 %v1083, 0.0
      %v1442 = vmax.f32 %v1088, 0.0
      %v1443 = vmax.f32 %v1091, 0.0
      %v1444 = vmax.f32 %v1096, 0.0
      %v1445 = vmax.f32 %v1099, 0.0
      %v1446 = vmax.f32 %v1104, 0.0
      %v1447 = vmax.f32 %v1107, 0.0
      %v1448 = vmax.f32 %v1112, 0.0
      %v1449 = vmax.f32 %v1115, 0.0
      %v1450 = vmax.f32 %v1120, 0.0
      %v1451 = vmax.f32 %v1123, 0.0
      %v1452 = vmax.f32 %v1128, 0.0
      %v1453 = vmax.f32 %v1131, 0.0
      %v1454 = vmax.f32 %v1136, 0.0
      %v1455 = vmax.f32 %v1139, 0.0
      %v1456 = vmax.f32 %v1144, 0.0
      %v1457 = vmax.f32 %v1147, 0.0
      %v1458 = vmax.f32 %v1152, 0.0
      %v1459 = vmax.f32 %v1155, 0.0
      %v1460 = vmax.f32 %v1160, 0.0
      %v1461 = vmax.f32 %v1163, 0.0
      %v1462 = vmax.f32 %v1168, 0.0
      %v1463 = vmax.f32 %v1171, 0.0
      %v1464 = vmax.f32 %v1176, 0.0
      %v1465 = vmax.f32 %v1179, 0.0
      %v1466 = vmax.f32 %v1184, 0.0
      %v1467 = vmax.f32 %v1187, 0.0
      %v1468 = vmax.f32 %v1192, 0.0
      %v1469 = vmax.f32 %v1195, 0.0
      %v1470 = vmax.f32 %v1200, 0.0
      %v1471 = vmax.f32 %v1203, 0.0
      %v1472 = vmax.f32 %v1208, 0.0
      %v1473 = vmax.f32 %v1211, 0.0
      %v1474 = vmax.f32 %v1216, 0.0
      %v1475 = vmax.f32 %v1219, 0.0
      %v1476 = vmax.f32 %v1224, 0.0
      %v1477 = vmax.f32 %v1227, 0.0
      %v1478 = vmax.f32 %v1232, 0.0
      %v1479 = vmax.f32 %v1235, 0.0
      %v1480 = vmax.f32 %v1240, 0.0
      %v1481 = vmax.f32 %v1243, 0.0
      %v1482 = vmax.f32 %v1248, 0.0
      %v1483 = vmax.f32 %v1251, 0.0
      %v1484 = vmax.f32 %v1256, 0.0
      %v1485 = vmax.f32 %v1259, 0.0
      %v1486 = vmax.f32 %v1264, 0.0
      %v1487 = vmax.f32 %v1267, 0.0
      %v1488 = vmax.f32 %v1272, 0.0
      %v1489 = vmax.f32 %v1275, 0.0
      %v1490 = vmax.f32 %v1280, 0.0
      %v1491 = vmax.f32 %v1283, 0.0
      %v1492 = vmax.f32 %v1288, 0.0
      %v1493 = vmax.f32 %v1291, 0.0
      %v1494 = vmax.f32 %v1296, 0.0
      %v1495 = vmax.f32 %v1299, 0.0
      %v1496 = vmax.f32 %v1304, 0.0
      %v1497 = vmax.f32 %v1307, 0.0
      %v1498 = vmax.f32 %v1312, 0.0
      %v1499 = vmax.f32 %v1315, 0.0
      %v1500 = vmax.f32 %v1320, 0.0
      %v1501 = vmax.f32 %v1323, 0.0
      %v1502 = vmax.f32 %v1328, 0.0
      %v1503 = vmax.f32 %v1331, 0.0
      %v1504 = vmax.f32 %v1336, 0.0
      %v1505 = vmax.f32 %v1339, 0.0
      %v1506 = vmax.f32 %v1344, 0.0
      %v1507 = vmax.f32 %v1347, 0.0
      %v1508 = vmax.f32 %v1352, 0.0
      %v1509 = vmax.f32 %v1355, 0.0
      %v1510 = vmax.f32 %v1360, 0.0
      %v1511 = vmax.f32 %v1363, 0.0
      %v1512 = vmax.f32 %v1368, 0.0
      %v1513 = vmax.f32 %v1371, 0.0
      %v1514 = vmax.f32 %v1376, 0.0
      %v1515 = vmax.f32 %v1379, 0.0
      %v1516 = vmax.f32 %v1384, 0.0
      %v1517 = vmax.f32 %v1387, 0.0
      %v1518 = vmin.f32 %v1390, 6.0
      %v1519 = vmin.f32 %v1391, 6.0
      %v1520 = vmin.f32 %v1392, 6.0
      %v1521 = vmin.f32 %v1393, 6.0
      %v1522 = vmin.f32 %v1394, 6.0
      %v1523 = vmin.f32 %v1395, 6.0
      %v1524 = vmin.f32 %v1396, 6.0
      %v1525 = vmin.f32 %v1397, 6.0
      %v1526 = vmin.f32 %v1398, 6.0
      %v1527 = vmin.f32 %v1399, 6.0
      %v1528 = vmin.f32 %v1400, 6.0
      %v1529 = vmin.f32 %v1401, 6.0
      %v1530 = vmin.f32 %v1402, 6.0
      %v1531 = vmin.f32 %v1403, 6.0
      %v1532 = vmin.f32 %v1404, 6.0
      %v1533 = vmin.f32 %v1405, 6.0
      %v1534 = vmin.f32 %v1406, 6.0
      %v1535 = vmin.f32 %v1407, 6.0
      %v1536 = vmin.f32 %v1408, 6.0
      %v1537 = vmin.f32 %v1409, 6.0
      %v1538 = vmin.f32 %v1410, 6.0
      %v1539 = vmin.f32 %v1411, 6.0
      %v1540 = vmin.f32 %v1412, 6.0
      %v1541 = vmin.f32 %v1413, 6.0
      %v1542 = vmin.f32 %v1414, 6.0
      %v1543 = vmin.f32 %v1415, 6.0
      %v1544 = vmin.f32 %v1416, 6.0
      %v1545 = vmin.f32 %v1417, 6.0
      %v1546 = vmin.f32 %v1418, 6.0
      %v1547 = vmin.f32 %v1419, 6.0
      %v1548 = vmin.f32 %v1420, 6.0
      %v1549 = vmin.f32 %v1421, 6.0
      %v1550 = vmin.f32 %v1422, 6.0
      %v1551 = vmin.f32 %v1423, 6.0
      %v1552 = vmin.f32 %v1424, 6.0
      %v1553 = vmin.f32 %v1425, 6.0
      %v1554 = vmin.f32 %v1426, 6.0
      %v1555 = vmin.f32 %v1427, 6.0
      %v1556 = vmin.f32 %v1428, 6.0
      %v1557 = vmin.f32 %v1429, 6.0
      %v1558 = vmin.f32 %v1430, 6.0
      %v1559 = vmin.f32 %v1431, 6.0
      %v1560 = vmin.f32 %v1432, 6.0
      %v1561 = vmin.f32 %v1433, 6.0
      %v1562 = vmin.f32 %v1434, 6.0
      %v1563 = vmin.f32 %v1435, 6.0
      %v1564 = vmin.f32 %v1436, 6.0
      %v1565 = vmin.f32 %v1437, 6.0
      %v1566 = vmin.f32 %v1438, 6.0
      %v1567 = vmin.f32 %v1439, 6.0
      %v1568 = vmin.f32 %v1440, 6.0
      %v1569 = vmin.f32 %v1441, 6.0
      %v1570 = vmin.f32 %v1442, 6.0
      %v1571 = vmin.f32 %v1443, 6.0
      %v1572 = vmin.f32 %v1444, 6.0
      %v1573 = vmin.f32 %v1445, 6.0
      %v1574 = vmin.f32 %v1446, 6.0
      %v1575 = vmin.f32 %v1447, 6.0
      %v1576 = vmin.f32 %v1448, 6.0
      %v1577 = vmin.f32 %v1449, 6.0
      %v1578 = vmin.f32 %v1450, 6.0
      %v1579 = vmin.f32 %v1451, 6.0
      %v1580 = vmin.f32 %v1452, 6.0
      %v1581 = vmin.f32 %v1453, 6.0
      %v1582 = vmin.f32 %v1454, 6.0
      %v1583 = vmin.f32 %v1455, 6.0
      %v1584 = vmin.f32 %v1456, 6.0
      %v1585 = vmin.f32 %v1457, 6.0
      %v1586 = vmin.f32 %v1458, 6.0
      %v1587 = vmin.f32 %v1459, 6.0
      %v1588 = vmin.f32 %v1460, 6.0
      %v1589 = vmin.f32 %v1461, 6.0
      %v1590 = vmin.f32 %v1462, 6.0
      %v1591 = vmin.f32 %v1463, 6.0
      %v1592 = vmin.f32 %v1464, 6.0
      %v1593 = vmin.f32 %v1465, 6.0
      %v1594 = vmin.f32 %v1466, 6.0
      %v1595 = vmin.f32 %v1467, 6.0
      %v1596 = vmin.f32 %v1468, 6.0
      %v1597 = vmin.f32 %v1469, 6.0
      %v1598 = vmin.f32 %v1470, 6.0
      %v1599 = vmin.f32 %v1471, 6.0
      %v1600 = vmin.f32 %v1472, 6.0
      %v1601 = vmin.f32 %v1473, 6.0
      %v1602 = vmin.f32 %v1474, 6.0
      %v1603 = vmin.f32 %v1475, 6.0
      %v1604 = vmin.f32 %v1476, 6.0
      %v1605 = vmin.f32 %v1477, 6.0
      %v1606 = vmin.f32 %v1478, 6.0
      %v1607 = vmin.f32 %v1479, 6.0
      %v1608 = vmin.f32 %v1480, 6.0
      %v1609 = vmin.f32 %v1481, 6.0
      %v1610 = vmin.f32 %v1482, 6.0
      %v1611 = vmin.f32 %v1483, 6.0
      %v1612 = vmin.f32 %v1484, 6.0
      %v1613 = vmin.f32 %v1485, 6.0
      %v1614 = vmin.f32 %v1486, 6.0
      %v1615 = vmin.f32 %v1487, 6.0
      %v1616 = vmin.f32 %v1488, 6.0
      %v1617 = vmin.f32 %v1489, 6.0
      %v1618 = vmin.f32 %v1490, 6.0
      %v1619 = vmin.f32 %v1491, 6.0
      %v1620 = vmin.f32 %v1492, 6.0
      %v1621 = vmin.f32 %v1493, 6.0
      %v1622 = vmin.f32 %v1494, 6.0
      %v1623 = vmin.f32 %v1495, 6.0
      %v1624 = vmin.f32 %v1496, 6.0
      %v1625 = vmin.f32 %v1497, 6.0
      %v1626 = vmin.f32 %v1498, 6.0
      %v1627 = vmin.f32 %v1499, 6.0
      %v1628 = vmin.f32 %v1500, 6.0
      %v1629 = vmin.f32 %v1501, 6.0
      %v1630 = vmin.f32 %v1502, 6.0
      %v1631 = vmin.f32 %v1503, 6.0
      %v1632 = vmin.f32 %v1504, 6.0
      %v1633 = vmin.f32 %v1505, 6.0
      %v1634 = vmin.f32 %v1506, 6.0
      %v1635 = vmin.f32 %v1507, 6.0
      %v1636 = vmin.f32 %v1508, 6.0
      %v1637 = vmin.f32 %v1509, 6.0
      %v1638 = vmin.f32 %v1510, 6.0
      %v1639 = vmin.f32 %v1511, 6.0
      %v1640 = vmin.f32 %v1512, 6.0
      %v1641 = vmin.f32 %v1513, 6.0
      %v1642 = vmin.f32 %v1514, 6.0
      %v1643 = vmin.f32 %v1515, 6.0
      %v1644 = vmin.f32 %v1516, 6.0
      %v1645 = vmin.f32 %v1517, 6.0
      %v1646 = vpack.c.bf16 %v1519, %v1518
      %v1647 = vpack.c.bf16 %v1521, %v1520
      %v1648 = vpack.c.bf16 %v1523, %v1522
      %v1649 = vpack.c.bf16 %v1525, %v1524
      %v1650 = vpack.c.bf16 %v1527, %v1526
      %v1651 = vpack.c.bf16 %v1529, %v1528
      %v1652 = vpack.c.bf16 %v1531, %v1530
      %v1653 = vpack.c.bf16 %v1533, %v1532
      %v1654 = vpack.c.bf16 %v1535, %v1534
      %v1655 = vpack.c.bf16 %v1537, %v1536
      %v1656 = vpack.c.bf16 %v1539, %v1538
      %v1657 = vpack.c.bf16 %v1541, %v1540
      %v1658 = vpack.c.bf16 %v1543, %v1542
      %v1659 = vpack.c.bf16 %v1545, %v1544
      %v1660 = vpack.c.bf16 %v1547, %v1546
      %v1661 = vpack.c.bf16 %v1549, %v1548
      %v1662 = vpack.c.bf16 %v1551, %v1550
      %v1663 = vpack.c.bf16 %v1553, %v1552
      %v1664 = vpack.c.bf16 %v1555, %v1554
      %v1665 = vpack.c.bf16 %v1557, %v1556
      %v1666 = vpack.c.bf16 %v1559, %v1558
      %v1667 = vpack.c.bf16 %v1561, %v1560
      %v1668 = vpack.c.bf16 %v1563, %v1562
      %v1669 = vpack.c.bf16 %v1565, %v1564
      %v1670 = vpack.c.bf16 %v1567, %v1566
      %v1671 = vpack.c.bf16 %v1569, %v1568
      %v1672 = vpack.c.bf16 %v1571, %v1570
      %v1673 = vpack.c.bf16 %v1573, %v1572
      %v1674 = vpack.c.bf16 %v1575, %v1574
      %v1675 = vpack.c.bf16 %v1577, %v1576
      %v1676 = vpack.c.bf16 %v1579, %v1578
      %v1677 = vpack.c.bf16 %v1581, %v1580
      %v1678 = vpack.c.bf16 %v1583, %v1582
      %v1679 = vpack.c.bf16 %v1585, %v1584
      %v1680 = vpack.c.bf16 %v1587, %v1586
      %v1681 = vpack.c.bf16 %v1589, %v1588
      %v1682 = vpack.c.bf16 %v1591, %v1590
      %v1683 = vpack.c.bf16 %v1593, %v1592
      %v1684 = vpack.c.bf16 %v1595, %v1594
      %v1685 = vpack.c.bf16 %v1597, %v1596
      %v1686 = vpack.c.bf16 %v1599, %v1598
      %v1687 = vpack.c.bf16 %v1601, %v1600
      %v1688 = vpack.c.bf16 %v1603, %v1602
      %v1689 = vpack.c.bf16 %v1605, %v1604
      %v1690 = vpack.c.bf16 %v1607, %v1606
      %v1691 = vpack.c.bf16 %v1609, %v1608
      %v1692 = vpack.c.bf16 %v1611, %v1610
      %v1693 = vpack.c.bf16 %v1613, %v1612
      %v1694 = vpack.c.bf16 %v1615, %v1614
      %v1695 = vpack.c.bf16 %v1617, %v1616
      %v1696 = vpack.c.bf16 %v1619, %v1618
      %v1697 = vpack.c.bf16 %v1621, %v1620
      %v1698 = vpack.c.bf16 %v1623, %v1622
      %v1699 = vpack.c.bf16 %v1625, %v1624
      %v1700 = vpack.c.bf16 %v1627, %v1626
      %v1701 = vpack.c.bf16 %v1629, %v1628
      %v1702 = vpack.c.bf16 %v1631, %v1630
      %v1703 = vpack.c.bf16 %v1633, %v1632
      %v1704 = vpack.c.bf16 %v1635, %v1634
      %v1705 = vpack.c.bf16 %v1637, %v1636
      %v1706 = vpack.c.bf16 %v1639, %v1638
      %v1707 = vpack.c.bf16 %v1641, %v1640
      %v1708 = vpack.c.bf16 %v1643, %v1642
      %v1709 = vpack.c.bf16 %v1645, %v1644
      %v1774 = vunpack.c.l.b16 %v1646
      %v1775 = vunpack.c.h.b16 %v1646
      %v1776 = vunpack.c.l.b16 %v1647
      %v1777 = vunpack.c.h.b16 %v1647
      %v1778 = vunpack.c.l.b16 %v1648
      %v1779 = vunpack.c.h.b16 %v1648
      %v1780 = vunpack.c.l.b16 %v1649
      %v1781 = vunpack.c.h.b16 %v1649
      %v1782 = vunpack.c.l.b16 %v1650
      %v1783 = vunpack.c.h.b16 %v1650
      %v1784 = vunpack.c.l.b16 %v1651
      %v1785 = vunpack.c.h.b16 %v1651
      %v1786 = vunpack.c.l.b16 %v1652
      %v1787 = vunpack.c.h.b16 %v1652
      %v1788 = vunpack.c.l.b16 %v1653
      %v1789 = vunpack.c.h.b16 %v1653
      %v1790 = vunpack.c.l.b16 %v1654
      %v1791 = vunpack.c.h.b16 %v1654
      %v1792 = vunpack.c.l.b16 %v1655
      %v1793 = vunpack.c.h.b16 %v1655
      %v1794 = vunpack.c.l.b16 %v1656
      %v1795 = vunpack.c.h.b16 %v1656
      %v1796 = vunpack.c.l.b16 %v1657
      %v1797 = vunpack.c.h.b16 %v1657
      %v1798 = vunpack.c.l.b16 %v1658
      %v1799 = vunpack.c.h.b16 %v1658
      %v1800 = vunpack.c.l.b16 %v1659
      %v1801 = vunpack.c.h.b16 %v1659
      %v1802 = vunpack.c.l.b16 %v1660
      %v1803 = vunpack.c.h.b16 %v1660
      %v1804 = vunpack.c.l.b16 %v1661
      %v1805 = vunpack.c.h.b16 %v1661
      %v1806 = vunpack.c.l.b16 %v1662
      %v1807 = vunpack.c.h.b16 %v1662
      %v1808 = vunpack.c.l.b16 %v1663
      %v1809 = vunpack.c.h.b16 %v1663
      %v1810 = vunpack.c.l.b16 %v1664
      %v1811 = vunpack.c.h.b16 %v1664
      %v1812 = vunpack.c.l.b16 %v1665
      %v1813 = vunpack.c.h.b16 %v1665
      %v1814 = vunpack.c.l.b16 %v1666
      %v1815 = vunpack.c.h.b16 %v1666
      %v1816 = vunpack.c.l.b16 %v1667
      %v1817 = vunpack.c.h.b16 %v1667
      %v1818 = vunpack.c.l.b16 %v1668
      %v1819 = vunpack.c.h.b16 %v1668
      %v1820 = vunpack.c.l.b16 %v1669
      %v1821 = vunpack.c.h.b16 %v1669
      %v1822 = vunpack.c.l.b16 %v1670
      %v1823 = vunpack.c.h.b16 %v1670
      %v1824 = vunpack.c.l.b16 %v1671
      %v1825 = vunpack.c.h.b16 %v1671
      %v1826 = vunpack.c.l.b16 %v1672
      %v1827 = vunpack.c.h.b16 %v1672
      %v1828 = vunpack.c.l.b16 %v1673
      %v1829 = vunpack.c.h.b16 %v1673
      %v1830 = vunpack.c.l.b16 %v1674
      %v1831 = vunpack.c.h.b16 %v1674
      %v1832 = vunpack.c.l.b16 %v1675
      %v1833 = vunpack.c.h.b16 %v1675
      %v1834 = vunpack.c.l.b16 %v1676
      %v1835 = vunpack.c.h.b16 %v1676
      %v1836 = vunpack.c.l.b16 %v1677
      %v1837 = vunpack.c.h.b16 %v1677
      %v1838 = vunpack.c.l.b16 %v1678
      %v1839 = vunpack.c.h.b16 %v1678
      %v1840 = vunpack.c.l.b16 %v1679
      %v1841 = vunpack.c.h.b16 %v1679
      %v1842 = vunpack.c.l.b16 %v1680
      %v1843 = vunpack.c.h.b16 %v1680
      %v1844 = vunpack.c.l.b16 %v1681
      %v1845 = vunpack.c.h.b16 %v1681
      %v1846 = vunpack.c.l.b16 %v1682
      %v1847 = vunpack.c.h.b16 %v1682
      %v1848 = vunpack.c.l.b16 %v1683
      %v1849 = vunpack.c.h.b16 %v1683
      %v1850 = vunpack.c.l.b16 %v1684
      %v1851 = vunpack.c.h.b16 %v1684
      %v1852 = vunpack.c.l.b16 %v1685
      %v1853 = vunpack.c.h.b16 %v1685
      %v1854 = vunpack.c.l.b16 %v1686
      %v1855 = vunpack.c.h.b16 %v1686
      %v1856 = vunpack.c.l.b16 %v1687
      %v1857 = vunpack.c.h.b16 %v1687
      %v1858 = vunpack.c.l.b16 %v1688
      %v1859 = vunpack.c.h.b16 %v1688
      %v1860 = vunpack.c.l.b16 %v1689
      %v1861 = vunpack.c.h.b16 %v1689
      %v1862 = vunpack.c.l.b16 %v1690
      %v1863 = vunpack.c.h.b16 %v1690
      %v1864 = vunpack.c.l.b16 %v1691
      %v1865 = vunpack.c.h.b16 %v1691
      %v1866 = vunpack.c.l.b16 %v1692
      %v1867 = vunpack.c.h.b16 %v1692
      %v1868 = vunpack.c.l.b16 %v1693
      %v1869 = vunpack.c.h.b16 %v1693
      %v1870 = vunpack.c.l.b16 %v1694
      %v1871 = vunpack.c.h.b16 %v1694
      %v1872 = vunpack.c.l.b16 %v1695
      %v1873 = vunpack.c.h.b16 %v1695
      %v1874 = vunpack.c.l.b16 %v1696
      %v1875 = vunpack.c.h.b16 %v1696
      %v1876 = vunpack.c.l.b16 %v1697
      %v1877 = vunpack.c.h.b16 %v1697
      %v1878 = vunpack.c.l.b16 %v1698
      %v1879 = vunpack.c.h.b16 %v1698
      %v1880 = vunpack.c.l.b16 %v1699
      %v1881 = vunpack.c.h.b16 %v1699
      %v1882 = vunpack.c.l.b16 %v1700
      %v1883 = vunpack.c.h.b16 %v1700
      %v1884 = vunpack.c.l.b16 %v1701
      %v1885 = vunpack.c.h.b16 %v1701
      %v1886 = vunpack.c.l.b16 %v1702
      %v1887 = vunpack.c.h.b16 %v1702
      %v1888 = vunpack.c.l.b16 %v1703
      %v1889 = vunpack.c.h.b16 %v1703
      %v1890 = vunpack.c.l.b16 %v1704
      %v1891 = vunpack.c.h.b16 %v1704
      %v1892 = vunpack.c.l.b16 %v1705
      %v1893 = vunpack.c.h.b16 %v1705
      %v1894 = vunpack.c.l.b16 %v1706
      %v1895 = vunpack.c.h.b16 %v1706
      %v1896 = vunpack.c.l.b16 %v1707
      %v1897 = vunpack.c.h.b16 %v1707
      %v1898 = vunpack.c.l.b16 %v1708
      %v1899 = vunpack.c.h.b16 %v1708
      %v1900 = vunpack.c.l.b16 %v1709
      %v1901 = vunpack.c.h.b16 %v1709
      %v1902 = vpack.c.b16 %v1774, %v1774
      %v1903 = vpack.c.b16 %v1775, %v1775
      %v1904 = vpack.c.b16 %v1776, %v1776
      %v1905 = vpack.c.b16 %v1777, %v1777
      %v1906 = vpack.c.b16 %v1778, %v1778
      %v1907 = vpack.c.b16 %v1779, %v1779
      %v1908 = vpack.c.b16 %v1780, %v1780
      %v1909 = vpack.c.b16 %v1781, %v1781
      %v1910 = vpack.c.b16 %v1782, %v1782
      %v1911 = vpack.c.b16 %v1783, %v1783
      %v1912 = vpack.c.b16 %v1784, %v1784
      %v1913 = vpack.c.b16 %v1785, %v1785
      %v1914 = vpack.c.b16 %v1786, %v1786
      %v1915 = vpack.c.b16 %v1787, %v1787
      %v1916 = vpack.c.b16 %v1788, %v1788
      %v1917 = vpack.c.b16 %v1789, %v1789
      %v1918 = vpack.c.b16 %v1790, %v1790
      %v1919 = vpack.c.b16 %v1791, %v1791
      %v1920 = vpack.c.b16 %v1792, %v1792
      %v1921 = vpack.c.b16 %v1793, %v1793
      %v1922 = vpack.c.b16 %v1794, %v1794
      %v1923 = vpack.c.b16 %v1795, %v1795
      %v1924 = vpack.c.b16 %v1796, %v1796
      %v1925 = vpack.c.b16 %v1797, %v1797
      %v1926 = vpack.c.b16 %v1798, %v1798
      %v1927 = vpack.c.b16 %v1799, %v1799
      %v1928 = vpack.c.b16 %v1800, %v1800
      %v1929 = vpack.c.b16 %v1801, %v1801
      %v1930 = vpack.c.b16 %v1802, %v1802
      %v1931 = vpack.c.b16 %v1803, %v1803
      %v1932 = vpack.c.b16 %v1804, %v1804
      %v1933 = vpack.c.b16 %v1805, %v1805
      %v1934 = vpack.c.b16 %v1806, %v1806
      %v1935 = vpack.c.b16 %v1807, %v1807
      %v1936 = vpack.c.b16 %v1808, %v1808
      %v1937 = vpack.c.b16 %v1809, %v1809
      %v1938 = vpack.c.b16 %v1810, %v1810
      %v1939 = vpack.c.b16 %v1811, %v1811
      %v1940 = vpack.c.b16 %v1812, %v1812
      %v1941 = vpack.c.b16 %v1813, %v1813
      %v1942 = vpack.c.b16 %v1814, %v1814
      %v1943 = vpack.c.b16 %v1815, %v1815
      %v1944 = vpack.c.b16 %v1816, %v1816
      %v1945 = vpack.c.b16 %v1817, %v1817
      %v1946 = vpack.c.b16 %v1818, %v1818
      %v1947 = vpack.c.b16 %v1819, %v1819
      %v1948 = vpack.c.b16 %v1820, %v1820
      %v1949 = vpack.c.b16 %v1821, %v1821
      %v1950 = vpack.c.b16 %v1822, %v1822
      %v1951 = vpack.c.b16 %v1823, %v1823
      %v1952 = vpack.c.b16 %v1824, %v1824
      %v1953 = vpack.c.b16 %v1825, %v1825
      %v1954 = vpack.c.b16 %v1826, %v1826
      %v1955 = vpack.c.b16 %v1827, %v1827
      %v1956 = vpack.c.b16 %v1828, %v1828
      %v1957 = vpack.c.b16 %v1829, %v1829
      %v1958 = vpack.c.b16 %v1830, %v1830
      %v1959 = vpack.c.b16 %v1831, %v1831
      %v1960 = vpack.c.b16 %v1832, %v1832
      %v1961 = vpack.c.b16 %v1833, %v1833
      %v1962 = vpack.c.b16 %v1834, %v1834
      %v1963 = vpack.c.b16 %v1835, %v1835
      %v1964 = vpack.c.b16 %v1836, %v1836
      %v1965 = vpack.c.b16 %v1837, %v1837
      %v1966 = vpack.c.b16 %v1838, %v1838
      %v1967 = vpack.c.b16 %v1839, %v1839
      %v1968 = vpack.c.b16 %v1840, %v1840
      %v1969 = vpack.c.b16 %v1841, %v1841
      %v1970 = vpack.c.b16 %v1842, %v1842
      %v1971 = vpack.c.b16 %v1843, %v1843
      %v1972 = vpack.c.b16 %v1844, %v1844
      %v1973 = vpack.c.b16 %v1845, %v1845
      %v1974 = vpack.c.b16 %v1846, %v1846
      %v1975 = vpack.c.b16 %v1847, %v1847
      %v1976 = vpack.c.b16 %v1848, %v1848
      %v1977 = vpack.c.b16 %v1849, %v1849
      %v1978 = vpack.c.b16 %v1850, %v1850
      %v1979 = vpack.c.b16 %v1851, %v1851
      %v1980 = vpack.c.b16 %v1852, %v1852
      %v1981 = vpack.c.b16 %v1853, %v1853
      %v1982 = vpack.c.b16 %v1854, %v1854
      %v1983 = vpack.c.b16 %v1855, %v1855
      %v1984 = vpack.c.b16 %v1856, %v1856
      %v1985 = vpack.c.b16 %v1857, %v1857
      %v1986 = vpack.c.b16 %v1858, %v1858
      %v1987 = vpack.c.b16 %v1859, %v1859
      %v1988 = vpack.c.b16 %v1860, %v1860
      %v1989 = vpack.c.b16 %v1861, %v1861
      %v1990 = vpack.c.b16 %v1862, %v1862
      %v1991 = vpack.c.b16 %v1863, %v1863
      %v1992 = vpack.c.b16 %v1864, %v1864
      %v1993 = vpack.c.b16 %v1865, %v1865
      %v1994 = vpack.c.b16 %v1866, %v1866
      %v1995 = vpack.c.b16 %v1867, %v1867
      %v1996 = vpack.c.b16 %v1868, %v1868
      %v1997 = vpack.c.b16 %v1869, %v1869
      %v1998 = vpack.c.b16 %v1870, %v1870
      %v1999 = vpack.c.b16 %v1871, %v1871
      %v2000 = vpack.c.b16 %v1872, %v1872
      %v2001 = vpack.c.b16 %v1873, %v1873
      %v2002 = vpack.c.b16 %v1874, %v1874
      %v2003 = vpack.c.b16 %v1875, %v1875
      %v2004 = vpack.c.b16 %v1876, %v1876
      %v2005 = vpack.c.b16 %v1877, %v1877
      %v2006 = vpack.c.b16 %v1878, %v1878
      %v2007 = vpack.c.b16 %v1879, %v1879
      %v2008 = vpack.c.b16 %v1880, %v1880
      %v2009 = vpack.c.b16 %v1881, %v1881
      %v2010 = vpack.c.b16 %v1882, %v1882
      %v2011 = vpack.c.b16 %v1883, %v1883
      %v2012 = vpack.c.b16 %v1884, %v1884
      %v2013 = vpack.c.b16 %v1885, %v1885
      %v2014 = vpack.c.b16 %v1886, %v1886
      %v2015 = vpack.c.b16 %v1887, %v1887
      %v2016 = vpack.c.b16 %v1888, %v1888
      %v2017 = vpack.c.b16 %v1889, %v1889
      %v2018 = vpack.c.b16 %v1890, %v1890
      %v2019 = vpack.c.b16 %v1891, %v1891
      %v2020 = vpack.c.b16 %v1892, %v1892
      %v2021 = vpack.c.b16 %v1893, %v1893
      %v2022 = vpack.c.b16 %v1894, %v1894
      %v2023 = vpack.c.b16 %v1895, %v1895
      %v2024 = vpack.c.b16 %v1896, %v1896
      %v2025 = vpack.c.b16 %v1897, %v1897
      %v2026 = vpack.c.b16 %v1898, %v1898
      %v2027 = vpack.c.b16 %v1899, %v1899
      %v2028 = vpack.c.b16 %v1900, %v1900
      %v2029 = vpack.c.b16 %v1901, %v1901
      %vm2158 = vcmask 257024
      %2159 = vst.msk [vmem:[%s172] sm:$0xf] %vm2158, %v1902
      %2160 = vst.msk [vmem:[%s172 + $0x4] sm:$0xf] %vm2158, %v1903
      %2161 = vst.msk [vmem:[%s172 + $0x8] sm:$0xf] %vm2158, %v1904
      %2162 = vst.msk [vmem:[%s172 + $0xc] sm:$0xf] %vm2158, %v1905
      %2163 = vst.msk [vmem:[%s172 + $0x10] sm:$0xf] %vm2158, %v1906
      %2164 = vst.msk [vmem:[%s172 + $0x14] sm:$0xf] %vm2158, %v1907
      %2165 = vst.msk [vmem:[%s172 + $0x18] sm:$0xf] %vm2158, %v1908
      %2166 = vst.msk [vmem:[%s172 + $0x1c] sm:$0xf] %vm2158, %v1909
      %2167 = vst.msk [vmem:[%s172 + $0x20] sm:$0xf] %vm2158, %v1910
      %2168 = vst.msk [vmem:[%s172 + $0x24] sm:$0xf] %vm2158, %v1911
      %2169 = vst.msk [vmem:[%s172 + $0x28] sm:$0xf] %vm2158, %v1912
      %2170 = vst.msk [vmem:[%s172 + $0x2c] sm:$0xf] %vm2158, %v1913
      %2171 = vst.msk [vmem:[%s172 + $0x30] sm:$0xf] %vm2158, %v1914
      %2172 = vst.msk [vmem:[%s172 + $0x34] sm:$0xf] %vm2158, %v1915
      %2173 = vst.msk [vmem:[%s172 + $0x38] sm:$0xf] %vm2158, %v1916
      %2174 = vst.msk [vmem:[%s172 + $0x3c] sm:$0xf] %vm2158, %v1917
      %2175 = vst.msk [vmem:[%s172 + $0x40] sm:$0xf] %vm2158, %v1918
      %2176 = vst.msk [vmem:[%s172 + $0x44] sm:$0xf] %vm2158, %v1919
      %2177 = vst.msk [vmem:[%s172 + $0x48] sm:$0xf] %vm2158, %v1920
      %2178 = vst.msk [vmem:[%s172 + $0x4c] sm:$0xf] %vm2158, %v1921
      %2179 = vst.msk [vmem:[%s172 + $0x50] sm:$0xf] %vm2158, %v1922
      %2180 = vst.msk [vmem:[%s172 + $0x54] sm:$0xf] %vm2158, %v1923
      %2181 = vst.msk [vmem:[%s172 + $0x58] sm:$0xf] %vm2158, %v1924
      %2182 = vst.msk [vmem:[%s172 + $0x5c] sm:$0xf] %vm2158, %v1925
      %2183 = vst.msk [vmem:[%s172 + $0x60] sm:$0xf] %vm2158, %v1926
      %2184 = vst.msk [vmem:[%s172 + $0x64] sm:$0xf] %vm2158, %v1927
      %2185 = vst.msk [vmem:[%s172 + $0x68] sm:$0xf] %vm2158, %v1928
      %2186 = vst.msk [vmem:[%s172 + $0x6c] sm:$0xf] %vm2158, %v1929
      %2187 = vst.msk [vmem:[%s172 + $0x70] sm:$0xf] %vm2158, %v1930
      %2188 = vst.msk [vmem:[%s172 + $0x74] sm:$0xf] %vm2158, %v1931
      %2189 = vst.msk [vmem:[%s172 + $0x78] sm:$0xf] %vm2158, %v1932
      %2190 = vst.msk [vmem:[%s172 + $0x7c] sm:$0xf] %vm2158, %v1933
      %2191 = vst.msk [vmem:[%s172 + $0x80] sm:$0xf] %vm2158, %v1934
      %2192 = vst.msk [vmem:[%s172 + $0x84] sm:$0xf] %vm2158, %v1935
      %2193 = vst.msk [vmem:[%s172 + $0x88] sm:$0xf] %vm2158, %v1936
      %2194 = vst.msk [vmem:[%s172 + $0x8c] sm:$0xf] %vm2158, %v1937
      %2195 = vst.msk [vmem:[%s172 + $0x90] sm:$0xf] %vm2158, %v1938
      %2196 = vst.msk [vmem:[%s172 + $0x94] sm:$0xf] %vm2158, %v1939
      %2197 = vst.msk [vmem:[%s172 + $0x98] sm:$0xf] %vm2158, %v1940
      %2198 = vst.msk [vmem:[%s172 + $0x9c] sm:$0xf] %vm2158, %v1941
      %2199 = vst.msk [vmem:[%s172 + $0xa0] sm:$0xf] %vm2158, %v1942
      %2200 = vst.msk [vmem:[%s172 + $0xa4] sm:$0xf] %vm2158, %v1943
      %2201 = vst.msk [vmem:[%s172 + $0xa8] sm:$0xf] %vm2158, %v1944
      %2202 = vst.msk [vmem:[%s172 + $0xac] sm:$0xf] %vm2158, %v1945
      %2203 = vst.msk [vmem:[%s172 + $0xb0] sm:$0xf] %vm2158, %v1946
      %2204 = vst.msk [vmem:[%s172 + $0xb4] sm:$0xf] %vm2158, %v1947
      %2205 = vst.msk [vmem:[%s172 + $0xb8] sm:$0xf] %vm2158, %v1948
      %2206 = vst.msk [vmem:[%s172 + $0xbc] sm:$0xf] %vm2158, %v1949
      %2207 = vst.msk [vmem:[%s172 + $0xc0] sm:$0xf] %vm2158, %v1950
      %2208 = vst.msk [vmem:[%s172 + $0xc4] sm:$0xf] %vm2158, %v1951
      %2209 = vst.msk [vmem:[%s172 + $0xc8] sm:$0xf] %vm2158, %v1952
      %2210 = vst.msk [vmem:[%s172 + $0xcc] sm:$0xf] %vm2158, %v1953
      %2211 = vst.msk [vmem:[%s172 + $0xd0] sm:$0xf] %vm2158, %v1954
      %2212 = vst.msk [vmem:[%s172 + $0xd4] sm:$0xf] %vm2158, %v1955
      %2213 = vst.msk [vmem:[%s172 + $0xd8] sm:$0xf] %vm2158, %v1956
      %2214 = vst.msk [vmem:[%s172 + $0xdc] sm:$0xf] %vm2158, %v1957
      %2215 = vst.msk [vmem:[%s172 + $0xe0] sm:$0xf] %vm2158, %v1958
      %2216 = vst.msk [vmem:[%s172 + $0xe4] sm:$0xf] %vm2158, %v1959
      %2217 = vst.msk [vmem:[%s172 + $0xe8] sm:$0xf] %vm2158, %v1960
      %2218 = vst.msk [vmem:[%s172 + $0xec] sm:$0xf] %vm2158, %v1961
      %2219 = vst.msk [vmem:[%s172 + $0xf0] sm:$0xf] %vm2158, %v1962
      %2220 = vst.msk [vmem:[%s172 + $0xf4] sm:$0xf] %vm2158, %v1963
      %2221 = vst.msk [vmem:[%s172 + $0xf8] sm:$0xf] %vm2158, %v1964
      %2222 = vst.msk [vmem:[%s172 + $0xfc] sm:$0xf] %vm2158, %v1965
      %2223 = vst.msk [vmem:[%s172 + $0x100] sm:$0xf] %vm2158, %v1966
      %2224 = vst.msk [vmem:[%s172 + $0x104] sm:$0xf] %vm2158, %v1967
      %2225 = vst.msk [vmem:[%s172 + $0x108] sm:$0xf] %vm2158, %v1968
      %2226 = vst.msk [vmem:[%s172 + $0x10c] sm:$0xf] %vm2158, %v1969
      %2227 = vst.msk [vmem:[%s172 + $0x110] sm:$0xf] %vm2158, %v1970
      %2228 = vst.msk [vmem:[%s172 + $0x114] sm:$0xf] %vm2158, %v1971
      %2229 = vst.msk [vmem:[%s172 + $0x118] sm:$0xf] %vm2158, %v1972
      %2230 = vst.msk [vmem:[%s172 + $0x11c] sm:$0xf] %vm2158, %v1973
      %2231 = vst.msk [vmem:[%s172 + $0x120] sm:$0xf] %vm2158, %v1974
      %2232 = vst.msk [vmem:[%s172 + $0x124] sm:$0xf] %vm2158, %v1975
      %2233 = vst.msk [vmem:[%s172 + $0x128] sm:$0xf] %vm2158, %v1976
      %2234 = vst.msk [vmem:[%s172 + $0x12c] sm:$0xf] %vm2158, %v1977
      %2235 = vst.msk [vmem:[%s172 + $0x130] sm:$0xf] %vm2158, %v1978
      %2236 = vst.msk [vmem:[%s172 + $0x134] sm:$0xf] %vm2158, %v1979
      %2237 = vst.msk [vmem:[%s172 + $0x138] sm:$0xf] %vm2158, %v1980
      %2238 = vst.msk [vmem:[%s172 + $0x13c] sm:$0xf] %vm2158, %v1981
      %2239 = vst.msk [vmem:[%s172 + $0x140] sm:$0xf] %vm2158, %v1982
      %2240 = vst.msk [vmem:[%s172 + $0x144] sm:$0xf] %vm2158, %v1983
      %2241 = vst.msk [vmem:[%s172 + $0x148] sm:$0xf] %vm2158, %v1984
      %2242 = vst.msk [vmem:[%s172 + $0x14c] sm:$0xf] %vm2158, %v1985
      %2243 = vst.msk [vmem:[%s172 + $0x150] sm:$0xf] %vm2158, %v1986
      %2244 = vst.msk [vmem:[%s172 + $0x154] sm:$0xf] %vm2158, %v1987
      %2245 = vst.msk [vmem:[%s172 + $0x158] sm:$0xf] %vm2158, %v1988
      %2246 = vst.msk [vmem:[%s172 + $0x15c] sm:$0xf] %vm2158, %v1989
      %2247 = vst.msk [vmem:[%s172 + $0x160] sm:$0xf] %vm2158, %v1990
      %2248 = vst.msk [vmem:[%s172 + $0x164] sm:$0xf] %vm2158, %v1991
      %2249 = vst.msk [vmem:[%s172 + $0x168] sm:$0xf] %vm2158, %v1992
      %2250 = vst.msk [vmem:[%s172 + $0x16c] sm:$0xf] %vm2158, %v1993
      %2251 = vst.msk [vmem:[%s172 + $0x170] sm:$0xf] %vm2158, %v1994
      %2252 = vst.msk [vmem:[%s172 + $0x174] sm:$0xf] %vm2158, %v1995
      %2253 = vst.msk [vmem:[%s172 + $0x178] sm:$0xf] %vm2158, %v1996
      %2254 = vst.msk [vmem:[%s172 + $0x17c] sm:$0xf] %vm2158, %v1997
      %2255 = vst.msk [vmem:[%s172 + $0x180] sm:$0xf] %vm2158, %v1998
      %2256 = vst.msk [vmem:[%s172 + $0x184] sm:$0xf] %vm2158, %v1999
      %2257 = vst.msk [vmem:[%s172 + $0x188] sm:$0xf] %vm2158, %v2000
      %2258 = vst.msk [vmem:[%s172 + $0x18c] sm:$0xf] %vm2158, %v2001
      %2259 = vst.msk [vmem:[%s172 + $0x190] sm:$0xf] %vm2158, %v2002
      %2260 = vst.msk [vmem:[%s172 + $0x194] sm:$0xf] %vm2158, %v2003
      %2261 = vst.msk [vmem:[%s172 + $0x198] sm:$0xf] %vm2158, %v2004
      %2262 = vst.msk [vmem:[%s172 + $0x19c] sm:$0xf] %vm2158, %v2005
      %2263 = vst.msk [vmem:[%s172 + $0x1a0] sm:$0xf] %vm2158, %v2006
      %2264 = vst.msk [vmem:[%s172 + $0x1a4] sm:$0xf] %vm2158, %v2007
      %2265 = vst.msk [vmem:[%s172 + $0x1a8] sm:$0xf] %vm2158, %v2008
      %2266 = vst.msk [vmem:[%s172 + $0x1ac] sm:$0xf] %vm2158, %v2009
      %2267 = vst.msk [vmem:[%s172 + $0x1b0] sm:$0xf] %vm2158, %v2010
      %2268 = vst.msk [vmem:[%s172 + $0x1b4] sm:$0xf] %vm2158, %v2011
      %2269 = vst.msk [vmem:[%s172 + $0x1b8] sm:$0xf] %vm2158, %v2012
      %2270 = vst.msk [vmem:[%s172 + $0x1bc] sm:$0xf] %vm2158, %v2013
      %2271 = vst.msk [vmem:[%s172 + $0x1c0] sm:$0xf] %vm2158, %v2014
      %2272 = vst.msk [vmem:[%s172 + $0x1c4] sm:$0xf] %vm2158, %v2015
      %2273 = vst.msk [vmem:[%s172 + $0x1c8] sm:$0xf] %vm2158, %v2016
      %2274 = vst.msk [vmem:[%s172 + $0x1cc] sm:$0xf] %vm2158, %v2017
      %2275 = vst.msk [vmem:[%s172 + $0x1d0] sm:$0xf] %vm2158, %v2018
      %2276 = vst.msk [vmem:[%s172 + $0x1d4] sm:$0xf] %vm2158, %v2019
      %2277 = vst.msk [vmem:[%s172 + $0x1d8] sm:$0xf] %vm2158, %v2020
      %2278 = vst.msk [vmem:[%s172 + $0x1dc] sm:$0xf] %vm2158, %v2021
      %2279 = vst.msk [vmem:[%s172 + $0x1e0] sm:$0xf] %vm2158, %v2022
      %2280 = vst.msk [vmem:[%s172 + $0x1e4] sm:$0xf] %vm2158, %v2023
      %2281 = vst.msk [vmem:[%s172 + $0x1e8] sm:$0xf] %vm2158, %v2024
      %2282 = vst.msk [vmem:[%s172 + $0x1ec] sm:$0xf] %vm2158, %v2025
      %2283 = vst.msk [vmem:[%s172 + $0x1f0] sm:$0xf] %vm2158, %v2026
      %2284 = vst.msk [vmem:[%s172 + $0x1f4] sm:$0xf] %vm2158, %v2027
      %2285 = vst.msk [vmem:[%s172 + $0x1f8] sm:$0xf] %vm2158, %v2028
      %2286 = vst.msk [vmem:[%s172 + $0x1fc] sm:$0xf] %vm2158, %v2029
      %s2287 = smul.u32 128, %s14
      %p2288 = scmp.lt.s32.totalorder %s2287, 255
      %s2289 = scalar_select %p2288, %s2287, 255
      %s2290 = smul.addr %s2289, 4
      %s2291 = scalar_lea.vmem %s3, %s2290
      // Predicated region
      $region33: #{tpu_custom_call.1} parent=31 // pred_check
        %p2292 = pneg %p100
      $region34: #{tpu_custom_call.1} parent=31 // pred_check_branch
        %2294 = sbr.rel (%p2292) target = $region36
      $region35: #{tpu_custom_call.1} parent=31 // pred_region
        %s2295 = smul.u32 128, %s14
      $region36: #{tpu_custom_call.1} parent=31 // pred_fallthru
        _
    $region32: #{tpu_custom_call.1} parent=5 // pred_fallthru
      _
    %p2296 = scmp.le.s32.totalorder 2, %s9
    // Predicated region
    $region37: #{tpu_custom_call.1} parent=5 // pred_check
      %p2297 = pneg %p2296
    $region38: #{tpu_custom_call.1} parent=5 // pred_check_branch
      %2299 = sbr.rel (%p2297) target = $region40
    $region39: #{tpu_custom_call.1} parent=5 // pred_region
      %s2300 = ssub.s32 %s9, 2
      // Predicated region
      $region41: #{tpu_custom_call.1} parent=39 // pred_check
        %p2301 = pneg %p106
      $region42: #{tpu_custom_call.1} parent=39 // pred_check_branch
        %2303 = sbr.rel (%p2301) target = $region44
      $region43: #{tpu_custom_call.1} parent=39 // pred_region
        %s2304 = smul.u32 128, %s15
        %p2305 = scmp.lt.s32.totalorder %s2304, 255
        %s2306 = scalar_select %p2305, %s2304, 255
        %s2307 = smul.addr %s2306, 4
        %s2308 = scalar_lea.vmem %s3, %s2307
      $region44: #{tpu_custom_call.1} parent=39 // pred_fallthru
        _
    $region40: #{tpu_custom_call.1} parent=5 // pred_fallthru
      _
  $region6: #{tpu_custom_call.1} parent=0 // loop_footer
    %s13 = sadd.s32 1, %s9
  $region7: #{tpu_custom_call.1} parent=0 // loop_footer_branch
    %8 = sbr.rel target = $region3
  $region8: #{tpu_custom_call.1} parent=0 // loop_exit
    _

</llo_original>
